<compile_context>
chip_gen: v7x
topology: tpu7x:2x2x1
jax: 0.10.0
libtpu: 0.0.40
codegen_flags: <defaults>
</compile_context>

<pallas_src>
import functools

import jax
import jax.numpy as jnp
from jax.experimental import pallas as pl
from jax.experimental.pallas import tpu as pltpu

DIMS = [403, 350, 300, 250, 200, 150, 100, 75, 50, 25, 1]
N_LINEAR = 10       # number of Linear layers
N_BN = 9            # number of BatchNorm1d(1) layers
BN_EPS = 1e-5


def _round_up(x, m):
    return ((x + m - 1) // m) * m


# Padded per-layer dims (multiples of 128).  PDIMS[i] is the padded input dim
# of layer i and PDIMS[i+1] its padded output dim, so consecutive layers chain
# without reshapes: [512, 384, 384, 256, 256, 256, 128, 128, 128, 128, 128].
PDIMS = [_round_up(d, 128) for d in DIMS]

# Flat-buffer layout: weights stacked along rows, biases along lanes.
W_ROW_OFF = [sum(PDIMS[:i]) for i in range(N_LINEAR)]          # 128-aligned
W_TOTAL_ROWS = sum(PDIMS[:N_LINEAR])                           # 2560
W_COLS = max(PDIMS[1:])                                        # 384
B_COL_OFF = [sum(PDIMS[1:i + 1]) for i in range(N_LINEAR)]     # 128-aligned
B_TOTAL_COLS = sum(PDIMS[1:])                                  # 2176


def mlp_kernel(x_ref, w_ref, b_ref, out_ref):
    """x_ref:  (tm, 512) bf16 batch tile (features zero-padded 403->512).
    w_ref:  (2560, 384) bf16 -- all 10 BN-folded, zero-padded weights stacked
            along rows at 128-aligned offsets (resident in VMEM, constant
            index map).
    b_ref:  (1, 2176) f32 -- all 10 biases concatenated at 128-aligned lane
            offsets.
    out_ref:(tm, 128) f32 -- lane-dense output tile; only lane 0 is real."""
    h = x_ref[...]                                             # bf16 activations
    for i in range(N_LINEAR):
        r0, din_p = W_ROW_OFF[i], PDIMS[i]
        c0, dout_p = B_COL_OFF[i], PDIMS[i + 1]
        w = w_ref[r0:r0 + din_p, :dout_p]          # static, tile-aligned slice
        b = b_ref[:, c0:c0 + dout_p]               # f32 (1, dout_p)
        acc = jnp.dot(h, w, preferred_element_type=jnp.float32) + b
        if i < 6:
            acc = jnp.maximum(acc, 0.0)                        # ReLU
        elif i < N_BN:
            acc = jnp.clip(acc, 0.0, 6.0)                      # ReLU6
        else:
            acc = jax.nn.sigmoid(acc)                          # final Sigmoid
        # Dropout = identity in eval mode; BN already folded into (w, b).
        h = acc if i == N_LINEAR - 1 else acc.astype(jnp.bfloat16)
    out_ref[...] = h                                           # (tm, 128) f32


def init_params(key):
    linear = []
    for i in range(N_LINEAR):
        din, dout = DIMS[i], DIMS[i + 1]
        key, kw, kb = jax.random.split(key, 3)
        bound = 1.0 / jnp.sqrt(float(din))                 # PyTorch Linear default init
        W = jax.random.uniform(kw, (din, dout), jnp.float32, -bound, bound)
        b = jax.random.uniform(kb, (dout,), jnp.float32, -bound, bound)
        linear.append((W, b))
    # Deterministic, non-trivial BN running stats / affine params.
    key, k1, k2, k3, k4 = jax.random.split(key, 5)
    gamma = jax.random.uniform(k1, (N_BN,), jnp.float32, 0.9, 1.1)
    beta = jax.random.uniform(k2, (N_BN,), jnp.float32, -0.1, 0.1)
    rmean = jax.random.uniform(k3, (N_BN,), jnp.float32, -0.1, 0.1)
    rvar = jax.random.uniform(k4, (N_BN,), jnp.float32, 0.9, 1.1)
    return {"linear": linear, "bn": (gamma, beta, rmean, rvar)}


def prepare_params(params):
    """One-time host prep.  Folds the BN eval-mode scalar affine into each
    Linear (exact), zero-pads every dim to a multiple of 128, stacks all ten
    weights into one bf16 buffer (rows) and all ten biases into one f32
    buffer (lanes).  Returns (wbuf, bbuf)."""
    gamma, beta, rmean, rvar = params["bn"]
    scale = gamma / jnp.sqrt(rvar + BN_EPS)
    shift = beta - rmean * scale
    wbuf = jnp.zeros((W_TOTAL_ROWS, W_COLS), jnp.float32)
    bbuf = jnp.zeros((1, B_TOTAL_COLS), jnp.float32)
    for i in range(N_LINEAR):
        W, b = params["linear"][i]
        if i < N_BN:
            W = W * scale[i]
            b = b * scale[i] + shift[i]
        r0, c0 = W_ROW_OFF[i], B_COL_OFF[i]
        wbuf = wbuf.at[r0:r0 + DIMS[i], :DIMS[i + 1]].set(W)
        bbuf = bbuf.at[0, c0:c0 + DIMS[i + 1]].set(b)
    return wbuf.astype(jnp.bfloat16), bbuf


def _choose_tm(N, tm):
    """Batch tile: multiple of 16 (bf16 sublane packing); capped so the grid
    has >= 2 steps whenever N allows (keeps both v7x TensorCores busy)."""
    tm = min(tm, _round_up(N, 16))
    if N > 16:
        tm = min(tm, _round_up((N + 1) // 2, 16))
    return max(16, _round_up(tm, 16))


def lmci_forward(x, wbuf, bbuf, tm=1024):
    """x: (N, 1, 403) f32 -> (N, 1, 1) f32 (eval-mode forward).

    tm is the batch tile; the default (1024) amortizes the ~0.35 us per-step
    pipeline overhead.  Small tm (e.g. 16) should only be used for tests.
    Accuracy is bf16-matmul limited (~1e-2 vs exact f32)."""
    N = x.shape[0]
    x2 = x.reshape(N, DIMS[0]).astype(jnp.bfloat16)
    x2 = jnp.pad(x2, ((0, 0), (0, PDIMS[0] - DIMS[0])))   # 403 -> 512 lanes
    tm = _choose_tm(N, tm)
    Np = _round_up(N, tm)
    if Np != N:
        x2 = jnp.pad(x2, ((0, Np - N), (0, 0)))           # batch pad only

    out = pl.pallas_call(
        mlp_kernel,
        out_shape=jax.ShapeDtypeStruct((Np, PDIMS[-1]), jnp.float32),
        grid=(Np // tm,),
        in_specs=[
            pl.BlockSpec((tm, PDIMS[0]), lambda i: (i, 0)),       # x tile
            pl.BlockSpec(wbuf.shape, lambda i: (0, 0)),           # resident weights
            pl.BlockSpec(bbuf.shape, lambda i: (0, 0)),           # resident biases
        ],
        out_specs=pl.BlockSpec((tm, PDIMS[-1]), lambda i: (i, 0)),
        compiler_params=pltpu.CompilerParams(
            dimension_semantics=("parallel",),
            vmem_limit_bytes=48 * 1024 * 1024,
        ),
    )(x2, wbuf, bbuf)
    return out[:N, :1].reshape(N, 1, 1)


def reference_forward(x, params):
    """Pure-JAX f32 reference (eval-mode PyTorch semantics) for verification."""
    gamma, beta, rmean, rvar = params["bn"]
    h = x.reshape(x.shape[0], DIMS[0]).astype(jnp.float32)
    for i in range(N_LINEAR):
        W, b = params["linear"][i]
        h = h @ W + b
        if i < N_BN:
            h = (h - rmean[i]) / jnp.sqrt(rvar[i] + BN_EPS) * gamma[i] + beta[i]
            h = jnp.maximum(h, 0.0) if i < 6 else jnp.clip(h, 0.0, 6.0)
        else:
            h = jax.nn.sigmoid(h)
    return h.reshape(x.shape[0], 1, 1)


if __name__ == "__main__":
    key = jax.random.PRNGKey(0)
    kparam, kx = jax.random.split(key)
    params = init_params(kparam)
    wbuf, bbuf = prepare_params(params)        # one-time: BN fold + pad + pack + bf16

    N = 64
    x = jax.random.normal(kx, (N, 1, DIMS[0]), jnp.float32)

    # Default tm is clamped to 32 at N=64 -> 2 grid steps (exercises the
    # pipelined / megacore-parallel batch grid).
    fwd = jax.jit(functools.partial(lmci_forward, wbuf=wbuf, bbuf=bbuf))
    out = jax.block_until_ready(fwd(x))

    ref = reference_forward(x, params)
    assert out.shape == (N, 1, 1)
    # Tolerance accounts for bf16 matmul operands (f32 accumulate) over 10
    # layers versus the exact-f32 reference; any wiring bug would be far larger.
    err = float(jnp.max(jnp.abs(out - ref)))
    assert err < 2e-2, (err, out[:4, 0, 0], ref[:4, 0, 0])
    print("KERNEL_OK")
</pallas_src>

<mosaic_0001>
module attributes {stable_mosaic.version = 11 : i64} {
  func.func @mlp_kernel(%arg0: i32, %arg1: memref<32x512xbf16, #tpu.memory_space<vmem>>, %arg2: memref<2560x384xbf16, #tpu.memory_space<vmem>>, %arg3: memref<1x2176xf32, #tpu.memory_space<vmem>>, %arg4: memref<32x128xf32, #tpu.memory_space<vmem>>) attributes {dimension_semantics = [#tpu.dimension_semantics<parallel>], iteration_bounds = array<i64: 2>, scalar_prefetch = 0 : i64, scratch_operands = 0 : i64, tpu.core_type = #tpu.core_type<tc>, window_params = [{transform_indices = @transform_0, window_bounds = array<i64: 32, 512>}, {pipeline_mode = #tpu.pipeline_mode<synchronous>, transform_indices = @transform_1, window_bounds = array<i64: 2560, 384>}, {pipeline_mode = #tpu.pipeline_mode<synchronous>, transform_indices = @transform_2, window_bounds = array<i64: 1, 2176>}, {transform_indices = @transform_3, window_bounds = array<i64: 32, 128>}]} {
    %c0 = arith.constant 0 : index
    %c0_0 = arith.constant 0 : index
    %0 = vector.load %arg1[%c0, %c0_0] : memref<32x512xbf16, #tpu.memory_space<vmem>>, vector<32x512xbf16>
    %c0_1 = arith.constant 0 : index
    %c0_2 = arith.constant 0 : index
    %1 = vector.load %arg2[%c0_1, %c0_2] : memref<2560x384xbf16, #tpu.memory_space<vmem>>, vector<512x384xbf16>
    %c0_3 = arith.constant 0 : index
    %c0_4 = arith.constant 0 : index
    %2 = vector.load %arg3[%c0_3, %c0_4] : memref<1x2176xf32, #tpu.memory_space<vmem>>, vector<1x384xf32>
    %cst = arith.constant dense<0.000000e+00> : vector<32x384xf32>
    %3 = tpu.matmul %0, %1, %cst {dimension_numbers = #tpu.dot_dimension_numbers<[1], [0], [0], [1], [0, 0, 1, 1], [], []>} : vector<32x512xbf16>, vector<512x384xbf16>, vector<32x384xf32> -> vector<32x384xf32>
    %4 = vector.broadcast %2 : vector<1x384xf32> to vector<32x384xf32>
    %5 = arith.addf %3, %4 : vector<32x384xf32>
    %cst_5 = arith.constant 0.000000e+00 : f32
    %6 = vector.broadcast %cst_5 : f32 to vector<32x384xf32>
    %7 = arith.maximumf %5, %6 : vector<32x384xf32>
    %8 = arith.truncf %7 : vector<32x384xf32> to vector<32x384xbf16>
    %c512 = arith.constant 512 : index
    %c0_6 = arith.constant 0 : index
    %9 = vector.load %arg2[%c512, %c0_6] : memref<2560x384xbf16, #tpu.memory_space<vmem>>, vector<384x384xbf16>
    %c0_7 = arith.constant 0 : index
    %c384 = arith.constant 384 : index
    %10 = vector.load %arg3[%c0_7, %c384] : memref<1x2176xf32, #tpu.memory_space<vmem>>, vector<1x384xf32>
    %cst_8 = arith.constant dense<0.000000e+00> : vector<32x384xf32>
    %11 = tpu.matmul %8, %9, %cst_8 {dimension_numbers = #tpu.dot_dimension_numbers<[1], [0], [0], [1], [0, 0, 1, 1], [], []>} : vector<32x384xbf16>, vector<384x384xbf16>, vector<32x384xf32> -> vector<32x384xf32>
    %12 = vector.broadcast %10 : vector<1x384xf32> to vector<32x384xf32>
    %13 = arith.addf %11, %12 : vector<32x384xf32>
    %cst_9 = arith.constant 0.000000e+00 : f32
    %14 = vector.broadcast %cst_9 : f32 to vector<32x384xf32>
    %15 = arith.maximumf %13, %14 : vector<32x384xf32>
    %16 = arith.truncf %15 : vector<32x384xf32> to vector<32x384xbf16>
    %c896 = arith.constant 896 : index
    %c0_10 = arith.constant 0 : index
    %17 = vector.load %arg2[%c896, %c0_10] : memref<2560x384xbf16, #tpu.memory_space<vmem>>, vector<384x256xbf16>
    %c0_11 = arith.constant 0 : index
    %c768 = arith.constant 768 : index
    %18 = vector.load %arg3[%c0_11, %c768] : memref<1x2176xf32, #tpu.memory_space<vmem>>, vector<1x256xf32>
    %cst_12 = arith.constant dense<0.000000e+00> : vector<32x256xf32>
    %19 = tpu.matmul %16, %17, %cst_12 {dimension_numbers = #tpu.dot_dimension_numbers<[1], [0], [0], [1], [0, 0, 1, 1], [], []>} : vector<32x384xbf16>, vector<384x256xbf16>, vector<32x256xf32> -> vector<32x256xf32>
    %20 = vector.broadcast %18 : vector<1x256xf32> to vector<32x256xf32>
    %21 = arith.addf %19, %20 : vector<32x256xf32>
    %cst_13 = arith.constant 0.000000e+00 : f32
    %22 = vector.broadcast %cst_13 : f32 to vector<32x256xf32>
    %23 = arith.maximumf %21, %22 : vector<32x256xf32>
    %24 = arith.truncf %23 : vector<32x256xf32> to vector<32x256xbf16>
    %c1280 = arith.constant 1280 : index
    %c0_14 = arith.constant 0 : index
    %25 = vector.load %arg2[%c1280, %c0_14] : memref<2560x384xbf16, #tpu.memory_space<vmem>>, vector<256x256xbf16>
    %c0_15 = arith.constant 0 : index
    %c1024 = arith.constant 1024 : index
    %26 = vector.load %arg3[%c0_15, %c1024] : memref<1x2176xf32, #tpu.memory_space<vmem>>, vector<1x256xf32>
    %cst_16 = arith.constant dense<0.000000e+00> : vector<32x256xf32>
    %27 = tpu.matmul %24, %25, %cst_16 {dimension_numbers = #tpu.dot_dimension_numbers<[1], [0], [0], [1], [0, 0, 1, 1], [], []>} : vector<32x256xbf16>, vector<256x256xbf16>, vector<32x256xf32> -> vector<32x256xf32>
    %28 = vector.broadcast %26 : vector<1x256xf32> to vector<32x256xf32>
    %29 = arith.addf %27, %28 : vector<32x256xf32>
    %cst_17 = arith.constant 0.000000e+00 : f32
    %30 = vector.broadcast %cst_17 : f32 to vector<32x256xf32>
    %31 = arith.maximumf %29, %30 : vector<32x256xf32>
    %32 = arith.truncf %31 : vector<32x256xf32> to vector<32x256xbf16>
    %c1536 = arith.constant 1536 : index
    %c0_18 = arith.constant 0 : index
    %33 = vector.load %arg2[%c1536, %c0_18] : memref<2560x384xbf16, #tpu.memory_space<vmem>>, vector<256x256xbf16>
    %c0_19 = arith.constant 0 : index
    %c1280_20 = arith.constant 1280 : index
    %34 = vector.load %arg3[%c0_19, %c1280_20] : memref<1x2176xf32, #tpu.memory_space<vmem>>, vector<1x256xf32>
    %cst_21 = arith.constant dense<0.000000e+00> : vector<32x256xf32>
    %35 = tpu.matmul %32, %33, %cst_21 {dimension_numbers = #tpu.dot_dimension_numbers<[1], [0], [0], [1], [0, 0, 1, 1], [], []>} : vector<32x256xbf16>, vector<256x256xbf16>, vector<32x256xf32> -> vector<32x256xf32>
    %36 = vector.broadcast %34 : vector<1x256xf32> to vector<32x256xf32>
    %37 = arith.addf %35, %36 : vector<32x256xf32>
    %cst_22 = arith.constant 0.000000e+00 : f32
    %38 = vector.broadcast %cst_22 : f32 to vector<32x256xf32>
    %39 = arith.maximumf %37, %38 : vector<32x256xf32>
    %40 = arith.truncf %39 : vector<32x256xf32> to vector<32x256xbf16>
    %c1792 = arith.constant 1792 : index
    %c0_23 = arith.constant 0 : index
    %41 = vector.load %arg2[%c1792, %c0_23] : memref<2560x384xbf16, #tpu.memory_space<vmem>>, vector<256x128xbf16>
    %c0_24 = arith.constant 0 : index
    %c1536_25 = arith.constant 1536 : index
    %42 = vector.load %arg3[%c0_24, %c1536_25] : memref<1x2176xf32, #tpu.memory_space<vmem>>, vector<1x128xf32>
    %cst_26 = arith.constant dense<0.000000e+00> : vector<32x128xf32>
    %43 = tpu.matmul %40, %41, %cst_26 {dimension_numbers = #tpu.dot_dimension_numbers<[1], [0], [0], [1], [0, 0, 1, 1], [], []>} : vector<32x256xbf16>, vector<256x128xbf16>, vector<32x128xf32> -> vector<32x128xf32>
    %44 = vector.broadcast %42 : vector<1x128xf32> to vector<32x128xf32>
    %45 = arith.addf %43, %44 : vector<32x128xf32>
    %cst_27 = arith.constant 0.000000e+00 : f32
    %46 = vector.broadcast %cst_27 : f32 to vector<32x128xf32>
    %47 = arith.maximumf %45, %46 : vector<32x128xf32>
    %48 = arith.truncf %47 : vector<32x128xf32> to vector<32x128xbf16>
    %c2048 = arith.constant 2048 : index
    %c0_28 = arith.constant 0 : index
    %49 = vector.load %arg2[%c2048, %c0_28] : memref<2560x384xbf16, #tpu.memory_space<vmem>>, vector<128x128xbf16>
    %c0_29 = arith.constant 0 : index
    %c1664 = arith.constant 1664 : index
    %50 = vector.load %arg3[%c0_29, %c1664] : memref<1x2176xf32, #tpu.memory_space<vmem>>, vector<1x128xf32>
    %cst_30 = arith.constant dense<0.000000e+00> : vector<32x128xf32>
    %51 = tpu.matmul %48, %49, %cst_30 {dimension_numbers = #tpu.dot_dimension_numbers<[1], [0], [0], [1], [0, 0, 1, 1], [], []>} : vector<32x128xbf16>, vector<128x128xbf16>, vector<32x128xf32> -> vector<32x128xf32>
    %52 = vector.broadcast %50 : vector<1x128xf32> to vector<32x128xf32>
    %53 = arith.addf %51, %52 : vector<32x128xf32>
    %cst_31 = arith.constant 0.000000e+00 : f32
    %cst_32 = arith.constant 6.000000e+00 : f32
    %54 = vector.broadcast %cst_31 : f32 to vector<32x128xf32>
    %55 = arith.maximumf %54, %53 : vector<32x128xf32>
    %56 = vector.broadcast %cst_32 : f32 to vector<32x128xf32>
    %57 = arith.minimumf %56, %55 : vector<32x128xf32>
    %58 = arith.truncf %57 : vector<32x128xf32> to vector<32x128xbf16>
    %c2176 = arith.constant 2176 : index
    %c0_33 = arith.constant 0 : index
    %59 = vector.load %arg2[%c2176, %c0_33] : memref<2560x384xbf16, #tpu.memory_space<vmem>>, vector<128x128xbf16>
    %c0_34 = arith.constant 0 : index
    %c1792_35 = arith.constant 1792 : index
    %60 = vector.load %arg3[%c0_34, %c1792_35] : memref<1x2176xf32, #tpu.memory_space<vmem>>, vector<1x128xf32>
    %cst_36 = arith.constant dense<0.000000e+00> : vector<32x128xf32>
    %61 = tpu.matmul %58, %59, %cst_36 {dimension_numbers = #tpu.dot_dimension_numbers<[1], [0], [0], [1], [0, 0, 1, 1], [], []>} : vector<32x128xbf16>, vector<128x128xbf16>, vector<32x128xf32> -> vector<32x128xf32>
    %62 = vector.broadcast %60 : vector<1x128xf32> to vector<32x128xf32>
    %63 = arith.addf %61, %62 : vector<32x128xf32>
    %cst_37 = arith.constant 0.000000e+00 : f32
    %cst_38 = arith.constant 6.000000e+00 : f32
    %64 = vector.broadcast %cst_37 : f32 to vector<32x128xf32>
    %65 = arith.maximumf %64, %63 : vector<32x128xf32>
    %66 = vector.broadcast %cst_38 : f32 to vector<32x128xf32>
    %67 = arith.minimumf %66, %65 : vector<32x128xf32>
    %68 = arith.truncf %67 : vector<32x128xf32> to vector<32x128xbf16>
    %c2304 = arith.constant 2304 : index
    %c0_39 = arith.constant 0 : index
    %69 = vector.load %arg2[%c2304, %c0_39] : memref<2560x384xbf16, #tpu.memory_space<vmem>>, vector<128x128xbf16>
    %c0_40 = arith.constant 0 : index
    %c1920 = arith.constant 1920 : index
    %70 = vector.load %arg3[%c0_40, %c1920] : memref<1x2176xf32, #tpu.memory_space<vmem>>, vector<1x128xf32>
    %cst_41 = arith.constant dense<0.000000e+00> : vector<32x128xf32>
    %71 = tpu.matmul %68, %69, %cst_41 {dimension_numbers = #tpu.dot_dimension_numbers<[1], [0], [0], [1], [0, 0, 1, 1], [], []>} : vector<32x128xbf16>, vector<128x128xbf16>, vector<32x128xf32> -> vector<32x128xf32>
    %72 = vector.broadcast %70 : vector<1x128xf32> to vector<32x128xf32>
    %73 = arith.addf %71, %72 : vector<32x128xf32>
    %cst_42 = arith.constant 0.000000e+00 : f32
    %cst_43 = arith.constant 6.000000e+00 : f32
    %74 = vector.broadcast %cst_42 : f32 to vector<32x128xf32>
    %75 = arith.maximumf %74, %73 : vector<32x128xf32>
    %76 = vector.broadcast %cst_43 : f32 to vector<32x128xf32>
    %77 = arith.minimumf %76, %75 : vector<32x128xf32>
    %78 = arith.truncf %77 : vector<32x128xf32> to vector<32x128xbf16>
    %c2432 = arith.constant 2432 : index
    %c0_44 = arith.constant 0 : index
    %79 = vector.load %arg2[%c2432, %c0_44] : memref<2560x384xbf16, #tpu.memory_space<vmem>>, vector<128x128xbf16>
    %c0_45 = arith.constant 0 : index
    %c2048_46 = arith.constant 2048 : index
    %80 = vector.load %arg3[%c0_45, %c2048_46] : memref<1x2176xf32, #tpu.memory_space<vmem>>, vector<1x128xf32>
    %cst_47 = arith.constant dense<0.000000e+00> : vector<32x128xf32>
    %81 = tpu.matmul %78, %79, %cst_47 {dimension_numbers = #tpu.dot_dimension_numbers<[1], [0], [0], [1], [0, 0, 1, 1], [], []>} : vector<32x128xbf16>, vector<128x128xbf16>, vector<32x128xf32> -> vector<32x128xf32>
    %82 = vector.broadcast %80 : vector<1x128xf32> to vector<32x128xf32>
    %83 = arith.addf %81, %82 : vector<32x128xf32>
    %84 = arith.negf %83 : vector<32x128xf32>
    %85 = math.exp %84 : vector<32x128xf32>
    %cst_48 = arith.constant 1.000000e+00 : f32
    %86 = vector.broadcast %cst_48 : f32 to vector<32x128xf32>
    %87 = arith.addf %86, %85 : vector<32x128xf32>
    %88 = arith.divf %86, %87 : vector<32x128xf32>
    %c0_49 = arith.constant 0 : index
    %c0_50 = arith.constant 0 : index
    %89 = vector.load %arg4[%c0_49, %c0_50] : memref<32x128xf32, #tpu.memory_space<vmem>>, vector<32x128xf32>
    tpu.vector_store %arg4[%c0_49, %c0_50], %88 {strides = array<i32>} : memref<32x128xf32, #tpu.memory_space<vmem>>, vector<32x128xf32>,
    return
  }
  func.func @transform_0(%arg0: i32) -> (i32, i32) {
    %c0_i32 = arith.constant 0 : i32
    %c0_i32_0 = arith.constant 0 : i32
    return %arg0, %c0_i32 : i32, i32
  }
  func.func @transform_1(%arg0: i32) -> (i32, i32) {
    %c0_i32 = arith.constant 0 : i32
    %c0_i32_0 = arith.constant 0 : i32
    %c0_i32_1 = arith.constant 0 : i32
    return %c0_i32, %c0_i32_0 : i32, i32
  }
  func.func @transform_2(%arg0: i32) -> (i32, i32) {
    %c0_i32 = arith.constant 0 : i32
    %c0_i32_0 = arith.constant 0 : i32
    %c0_i32_1 = arith.constant 0 : i32
    return %c0_i32, %c0_i32_0 : i32, i32
  }
  func.func @transform_3(%arg0: i32) -> (i32, i32) {
    %c0_i32 = arith.constant 0 : i32
    %c0_i32_0 = arith.constant 0 : i32
    return %arg0, %c0_i32 : i32, i32
  }
}

</mosaic_0001>

<llo_original>
// kernel: lmci_forward.1
$region0: #{lmci_forward.1}
  #allocation0 [shape = 'u32[]', space=smem, size = 0x4, offset = 0x4, fixed_abs, tag = 'smem constant byte address 0x4 - core index']
  #allocation1 [shape = 'u32[144,128]{1,0:T(1,128)}', space=vmem, size = 0x12000, scoped, tag = 'internal scratch']
  %s0 = inlined_call_operand.vmem [shape: bf16[64,512], index: 0, kind: input, shape index: {}]
  %s1 = inlined_call_operand.vmem [shape: bf16[2560,384], index: 1, kind: input, shape index: {}]
  %s2 = inlined_call_operand.vmem [shape: f32[1,2176], index: 2, kind: input, shape index: {}]
  %s3 = inlined_call_operand.vmem [shape: f32[64,128], index: 3, kind: output, shape index: {}]
  %s4 = sld [smem:[#allocation0]]
  $region45: #{lmci_forward.1} parent=0
    _
  %s6 = ssub.s32 1, %s4
  %s7 = scalar_select 0, %s6, %s4
  loop: start=0, step=1, limit=4
  $region2: #{lmci_forward.1} parent=0 // loop_pre_header
    _
  $region3: #{lmci_forward.1} parent=0 // loop_header
    %s9 = sphi 0, %s13
    %p10 = scmp.ge.s32.totalorder %s9, 4
    %s19 = sphi 0, %s21
    %s22 = sphi 0, %s19
    %s23 = sphi 0, %s22
    %s39 = sphi 0, %s23
    %s43 = sphi 0, %s43
    %s45 = sphi 0, %s43
    %s46 = sphi 0, %s45
    %s60 = sphi 0, %s46
    %s64 = sphi 0, %s64
    %s66 = sphi 0, %s64
    %s67 = sphi 0, %s66
    %s81 = sphi 0, %s67
    %s87 = sphi 0, %s89
    %s90 = sphi 0, %s87
    %s91 = sphi 0, %s90
    %s107 = sphi 0, %s91
  $region4: #{lmci_forward.1} parent=0 // loop_header_branch
    %12 = sbr.rel (%p10) target = $region8
  $region5: #{lmci_forward.1} parent=0 // loop_body
    %s14 = ssub.s32 %s9, 1
    %s15 = ssub.s32 %s9, 2
    %s16 = sadd.s32 %s9, 1
    %s17 = ssub.s32 %s9, %s16
    %p18 = scmp.eq.s32.totalorder %s17, 0
    %s20 = sadd.s32 %s19, 1
    %s21 = scalar_select %p18, %s19, %s20
    %p24 = pneg %p18
    %p25 = scmp.eq.s32.totalorder %s9, 1
    %p26 = por %p24, %p25
    %p27 = scmp.ne.s32.totalorder %s19, %s22
    %p28 = scmp.eq.s32.totalorder %s9, 0
    %p29 = por %p27, %p28
    %p30 = scmp.ne.s32.totalorder %s19, %s22
    %p31 = scmp.eq.s32.totalorder %s14, 1
    %p32 = por %p30, %p31
    %p33 = scmp.ne.s32.totalorder %s22, %s23
    %p34 = scmp.eq.s32.totalorder %s14, 0
    %p35 = por %p33, %p34
    %p36 = scmp.ne.s32.totalorder %s22, %s23
    %p37 = scmp.eq.s32.totalorder %s15, 1
    %p38 = por %p36, %p37
    %p40 = scmp.ne.s32.totalorder %s23, %s39
    %p41 = scmp.eq.s32.totalorder %s15, 0
    %p42 = por %p40, %p41
    %s44 = sadd.s32 %s43, 1
    %p47 = scmp.eq.s32.totalorder %s9, 1
    %p48 = scmp.ne.s32.totalorder %s43, %s45
    %p49 = scmp.eq.s32.totalorder %s9, 0
    %p50 = por %p48, %p49
    %p51 = scmp.ne.s32.totalorder %s43, %s45
    %p52 = scmp.eq.s32.totalorder %s14, 1
    %p53 = por %p51, %p52
    %p54 = scmp.ne.s32.totalorder %s45, %s46
    %p55 = scmp.eq.s32.totalorder %s14, 0
    %p56 = por %p54, %p55
    %p57 = scmp.ne.s32.totalorder %s45, %s46
    %p58 = scmp.eq.s32.totalorder %s15, 1
    %p59 = por %p57, %p58
    %p61 = scmp.ne.s32.totalorder %s46, %s60
    %p62 = scmp.eq.s32.totalorder %s15, 0
    %p63 = por %p61, %p62
    %s65 = sadd.s32 %s64, 1
    %p68 = scmp.eq.s32.totalorder %s9, 1
    %p69 = scmp.ne.s32.totalorder %s64, %s66
    %p70 = scmp.eq.s32.totalorder %s9, 0
    %p71 = por %p69, %p70
    %p72 = scmp.ne.s32.totalorder %s64, %s66
    %p73 = scmp.eq.s32.totalorder %s14, 1
    %p74 = por %p72, %p73
    %p75 = scmp.ne.s32.totalorder %s66, %s67
    %p76 = scmp.eq.s32.totalorder %s14, 0
    %p77 = por %p75, %p76
    %p78 = scmp.ne.s32.totalorder %s66, %s67
    %p79 = scmp.eq.s32.totalorder %s15, 1
    %p80 = por %p78, %p79
    %p82 = scmp.ne.s32.totalorder %s67, %s81
    %p83 = scmp.eq.s32.totalorder %s15, 0
    %p84 = por %p82, %p83
    %s85 = ssub.s32 %s9, %s16
    %p86 = scmp.eq.s32.totalorder %s85, 0
    %s88 = sadd.s32 %s87, 1
    %s89 = scalar_select %p86, %s87, %s88
    %p92 = pneg %p86
    %p93 = scmp.eq.s32.totalorder %s9, 1
    %p94 = por %p92, %p93
    %p95 = scmp.ne.s32.totalorder %s87, %s90
    %p96 = scmp.eq.s32.totalorder %s9, 0
    %p97 = por %p95, %p96
    %p98 = scmp.ne.s32.totalorder %s87, %s90
    %p99 = scmp.eq.s32.totalorder %s14, 1
    %p100 = por %p98, %p99
    %p101 = scmp.ne.s32.totalorder %s90, %s91
    %p102 = scmp.eq.s32.totalorder %s14, 0
    %p103 = por %p101, %p102
    %p104 = scmp.ne.s32.totalorder %s90, %s91
    %p105 = scmp.eq.s32.totalorder %s15, 1
    %p106 = por %p104, %p105
    %p108 = scmp.ne.s32.totalorder %s91, %s107
    %p109 = scmp.eq.s32.totalorder %s15, 0
    %p110 = por %p108, %p109
    %p111 = scmp.le.s32.totalorder 1, %s9
    %p112 = scmp.lt.s32.totalorder %s9, 3
    %p113 = pnand %p111, %p112
    %p114 = pneg %p113
    // Predicated region
    $region9: #{lmci_forward.1} parent=5 // pred_check
      _
    $region10: #{lmci_forward.1} parent=5 // pred_check_branch
      %116 = sbr.rel (%p113) target = $region12
    $region11: #{lmci_forward.1} parent=5 // pred_region
      %s117 = ssub.s32 %s9, 1
      // Predicated region
      $region13: #{lmci_forward.1} parent=11 // pred_check
        %p118 = pneg %p56
      $region14: #{lmci_forward.1} parent=11 // pred_check_branch
        %120 = sbr.rel (%p118) target = $region16
      $region15: #{lmci_forward.1} parent=11 // pred_region
        _
      $region16: #{lmci_forward.1} parent=11 // pred_fallthru
        _
      // Predicated region
      $region17: #{lmci_forward.1} parent=11 // pred_check
        %p121 = pneg %p77
      $region18: #{lmci_forward.1} parent=11 // pred_check_branch
        %123 = sbr.rel (%p121) target = $region20
      $region19: #{lmci_forward.1} parent=11 // pred_region
        _
      $region20: #{lmci_forward.1} parent=11 // pred_fallthru
        _
    $region12: #{lmci_forward.1} parent=5 // pred_fallthru
      _
    %p124 = scmp.lt.s32.totalorder %s9, 2
    // Predicated region
    $region21: #{lmci_forward.1} parent=5 // pred_check
      %p125 = pneg %p124
    $region22: #{lmci_forward.1} parent=5 // pred_check_branch
      %127 = sbr.rel (%p125) target = $region24
    $region23: #{lmci_forward.1} parent=5 // pred_region
      // Predicated region
      $region25: #{lmci_forward.1} parent=23 // pred_check
        %p128 = pneg %p29
      $region26: #{lmci_forward.1} parent=23 // pred_check_branch
        %130 = sbr.rel (%p128) target = $region28
      $region27: #{lmci_forward.1} parent=23 // pred_region
        %s131 = smul.u32 4, %s9
        %p132 = scmp.lt.s32.totalorder %s131, 7
        %s133 = scalar_select %p132, %s131, 7
        %s134 = smul.addr %s133, 4
        %s135 = smul.addr %s134, 4
        %s136 = scalar_lea.vmem %s0, %s135
        %s137 = smul.u32 4, %s9
      $region28: #{lmci_forward.1} parent=23 // pred_fallthru
        _
    $region24: #{lmci_forward.1} parent=5 // pred_fallthru
      _
    %p138 = scmp.le.s32.totalorder 1, %s9
    %p139 = scmp.lt.s32.totalorder %s9, 3
    %p140 = pnand %p138, %p139
    %p141 = pneg %p140
    // Predicated region
    $region29: #{lmci_forward.1} parent=5 // pred_check
      _
    $region30: #{lmci_forward.1} parent=5 // pred_check_branch
      %143 = sbr.rel (%p140) target = $region32
    $region31: #{lmci_forward.1} parent=5 // pred_region
      %s144 = ssub.s32 %s9, 1
      %s145 = smul.u32 4, %s14
      %p146 = scmp.lt.s32.totalorder %s145, 7
      %s147 = scalar_select %p146, %s145, 7
      %s148 = smul.addr %s147, 4
      %s149 = smul.addr %s148, 4
      %s150 = scalar_lea.vmem %s0, %s149
      %p151 = pneg %p35
      %p152 = pneg %p32
      %p153 = pneg %p56
      %p154 = pneg %p53
      %p155 = pneg %p77
      %p156 = pneg %p74
      %p157 = pneg %p103
      %p158 = pneg %p100
      %s159 = smul.u32 4, %s14
      %p160 = scmp.lt.s32.totalorder %s159, 7
      %s161 = scalar_select %p160, %s159, 7
      %s162 = smul.addr %s161, 8
      %s163 = scalar_lea.vmem %s3, %s162
      %s164 = smul.u32 4, %s14
      %p165 = scmp.lt.s32.totalorder %s164, 7
      %s166 = scalar_select %p165, %s164, 7
      %s167 = smul.addr %s166, 4
      %s168 = smul.addr %s167, 4
      %s169 = scalar_lea.vmem %s0, %s168
      %s170 = smul.u32 4, %s14
      %s171 = smul.u32 4, %s14
      %p172 = scmp.lt.s32.totalorder %s171, 7
      %s173 = scalar_select %p172, %s171, 7
      %s174 = smul.addr %s173, 8
      %s175 = scalar_lea.vmem %s3, %s174
      %s176 = smul.u32 4, %s14
      %v178 = vld [vmem:[%s169] sm:$0xff]
      %v179 = vld [vmem:[%s169 + $0x8] sm:$0xff]
      %v180 = vld [vmem:[%s169 + $0x10] sm:$0xff]
      %v181 = vld [vmem:[%s169 + $0x18] sm:$0xff]
      %v182 = vld [vmem:[%s169 + $0x20] sm:$0xff]
      %v183 = vld [vmem:[%s169 + $0x28] sm:$0xff]
      %v184 = vld [vmem:[%s169 + $0x30] sm:$0xff]
      %v185 = vld [vmem:[%s169 + $0x38] sm:$0xff]
      %v186 = vld [vmem:[%s1] sm:$0xff]
      %v187 = vld [vmem:[%s1 + $0x8] sm:$0xf]
      %v188 = vld [vmem:[%s1 + $0xc] sm:$0xff]
      %v189 = vld [vmem:[%s1 + $0x14] sm:$0xf]
      %v190 = vld [vmem:[%s1 + $0x18] sm:$0xff]
      %v191 = vld [vmem:[%s1 + $0x20] sm:$0xf]
      %v192 = vld [vmem:[%s1 + $0x24] sm:$0xff]
      %v193 = vld [vmem:[%s1 + $0x2c] sm:$0xf]
      %v194 = vld [vmem:[%s1 + $0x30] sm:$0xff]
      %v195 = vld [vmem:[%s1 + $0x38] sm:$0xf]
      %v196 = vld [vmem:[%s1 + $0x3c] sm:$0xff]
      %v197 = vld [vmem:[%s1 + $0x44] sm:$0xf]
      %v198 = vld [vmem:[%s1 + $0x48] sm:$0xff]
      %v199 = vld [vmem:[%s1 + $0x50] sm:$0xf]
      %v200 = vld [vmem:[%s1 + $0x54] sm:$0xff]
      %v201 = vld [vmem:[%s1 + $0x5c] sm:$0xf]
      %v202 = vld [vmem:[%s1 + $0x60] sm:$0xff]
      %v203 = vld [vmem:[%s1 + $0x68] sm:$0xf]
      %v204 = vld [vmem:[%s1 + $0x6c] sm:$0xff]
      %v205 = vld [vmem:[%s1 + $0x74] sm:$0xf]
      %v206 = vld [vmem:[%s1 + $0x78] sm:$0xff]
      %v207 = vld [vmem:[%s1 + $0x80] sm:$0xf]
      %v208 = vld [vmem:[%s1 + $0x84] sm:$0xff]
      %v209 = vld [vmem:[%s1 + $0x8c] sm:$0xf]
      %v210 = vld [vmem:[%s1 + $0x90] sm:$0xff]
      %v211 = vld [vmem:[%s1 + $0x98] sm:$0xf]
      %v212 = vld [vmem:[%s1 + $0x9c] sm:$0xff]
      %v213 = vld [vmem:[%s1 + $0xa4] sm:$0xf]
      %v214 = vld [vmem:[%s1 + $0xa8] sm:$0xff]
      %v215 = vld [vmem:[%s1 + $0xb0] sm:$0xf]
      %v216 = vld [vmem:[%s1 + $0xb4] sm:$0xff]
      %v217 = vld [vmem:[%s1 + $0xbc] sm:$0xf]
      %v218 = vld [vmem:[%s1 + $0xc0] sm:$0xff]
      %v219 = vld [vmem:[%s1 + $0xc8] sm:$0xf]
      %v220 = vld [vmem:[%s1 + $0xcc] sm:$0xff]
      %v221 = vld [vmem:[%s1 + $0xd4] sm:$0xf]
      %v222 = vld [vmem:[%s1 + $0xd8] sm:$0xff]
      %v223 = vld [vmem:[%s1 + $0xe0] sm:$0xf]
      %v224 = vld [vmem:[%s1 + $0xe4] sm:$0xff]
      %v225 = vld [vmem:[%s1 + $0xec] sm:$0xf]
      %v226 = vld [vmem:[%s1 + $0xf0] sm:$0xff]
      %v227 = vld [vmem:[%s1 + $0xf8] sm:$0xf]
      %v228 = vld [vmem:[%s1 + $0xfc] sm:$0xff]
      %v229 = vld [vmem:[%s1 + $0x104] sm:$0xf]
      %v230 = vld [vmem:[%s1 + $0x108] sm:$0xff]
      %v231 = vld [vmem:[%s1 + $0x110] sm:$0xf]
      %v232 = vld [vmem:[%s1 + $0x114] sm:$0xff]
      %v233 = vld [vmem:[%s1 + $0x11c] sm:$0xf]
      %v234 = vld [vmem:[%s1 + $0x120] sm:$0xff]
      %v235 = vld [vmem:[%s1 + $0x128] sm:$0xf]
      %v236 = vld [vmem:[%s1 + $0x12c] sm:$0xff]
      %v237 = vld [vmem:[%s1 + $0x134] sm:$0xf]
      %v238 = vld [vmem:[%s1 + $0x138] sm:$0xff]
      %v239 = vld [vmem:[%s1 + $0x140] sm:$0xf]
      %v240 = vld [vmem:[%s1 + $0x144] sm:$0xff]
      %v241 = vld [vmem:[%s1 + $0x14c] sm:$0xf]
      %v242 = vld [vmem:[%s1 + $0x150] sm:$0xff]
      %v243 = vld [vmem:[%s1 + $0x158] sm:$0xf]
      %v244 = vld [vmem:[%s1 + $0x15c] sm:$0xff]
      %v245 = vld [vmem:[%s1 + $0x164] sm:$0xf]
      %v246 = vld [vmem:[%s1 + $0x168] sm:$0xff]
      %v247 = vld [vmem:[%s1 + $0x170] sm:$0xf]
      %v248 = vld [vmem:[%s1 + $0x174] sm:$0xff]
      %v249 = vld [vmem:[%s1 + $0x17c] sm:$0xf]
      %v250 = vld [vmem:[%s1 + $0x180] sm:$0xff]
      %v251 = vld [vmem:[%s1 + $0x188] sm:$0xf]
      %v252 = vld [vmem:[%s1 + $0x18c] sm:$0xff]
      %v253 = vld [vmem:[%s1 + $0x194] sm:$0xf]
      %v254 = vld [vmem:[%s1 + $0x198] sm:$0xff]
      %v255 = vld [vmem:[%s1 + $0x1a0] sm:$0xf]
      %v256 = vld [vmem:[%s1 + $0x1a4] sm:$0xff]
      %v257 = vld [vmem:[%s1 + $0x1ac] sm:$0xf]
      %v258 = vld [vmem:[%s1 + $0x1b0] sm:$0xff]
      %v259 = vld [vmem:[%s1 + $0x1b8] sm:$0xf]
      %v260 = vld [vmem:[%s1 + $0x1bc] sm:$0xff]
      %v261 = vld [vmem:[%s1 + $0x1c4] sm:$0xf]
      %v262 = vld [vmem:[%s1 + $0x1c8] sm:$0xff]
      %v263 = vld [vmem:[%s1 + $0x1d0] sm:$0xf]
      %v264 = vld [vmem:[%s1 + $0x1d4] sm:$0xff]
      %v265 = vld [vmem:[%s1 + $0x1dc] sm:$0xf]
      %v266 = vld [vmem:[%s1 + $0x1e0] sm:$0xff]
      %v267 = vld [vmem:[%s1 + $0x1e8] sm:$0xf]
      %v268 = vld [vmem:[%s1 + $0x1ec] sm:$0xff]
      %v269 = vld [vmem:[%s1 + $0x1f4] sm:$0xf]
      %v270 = vld [vmem:[%s1 + $0x1f8] sm:$0xff]
      %v271 = vld [vmem:[%s1 + $0x200] sm:$0xf]
      %v272 = vld [vmem:[%s1 + $0x204] sm:$0xff]
      %v273 = vld [vmem:[%s1 + $0x20c] sm:$0xf]
      %v274 = vld [vmem:[%s1 + $0x210] sm:$0xff]
      %v275 = vld [vmem:[%s1 + $0x218] sm:$0xf]
      %v276 = vld [vmem:[%s1 + $0x21c] sm:$0xff]
      %v277 = vld [vmem:[%s1 + $0x224] sm:$0xf]
      %v278 = vld [vmem:[%s1 + $0x228] sm:$0xff]
      %v279 = vld [vmem:[%s1 + $0x230] sm:$0xf]
      %v280 = vld [vmem:[%s1 + $0x234] sm:$0xff]
      %v281 = vld [vmem:[%s1 + $0x23c] sm:$0xf]
      %v282 = vld [vmem:[%s1 + $0x240] sm:$0xff]
      %v283 = vld [vmem:[%s1 + $0x248] sm:$0xf]
      %v284 = vld [vmem:[%s1 + $0x24c] sm:$0xff]
      %v285 = vld [vmem:[%s1 + $0x254] sm:$0xf]
      %v286 = vld [vmem:[%s1 + $0x258] sm:$0xff]
      %v287 = vld [vmem:[%s1 + $0x260] sm:$0xf]
      %v288 = vld [vmem:[%s1 + $0x264] sm:$0xff]
      %v289 = vld [vmem:[%s1 + $0x26c] sm:$0xf]
      %v290 = vld [vmem:[%s1 + $0x270] sm:$0xff]
      %v291 = vld [vmem:[%s1 + $0x278] sm:$0xf]
      %v292 = vld [vmem:[%s1 + $0x27c] sm:$0xff]
      %v293 = vld [vmem:[%s1 + $0x284] sm:$0xf]
      %v294 = vld [vmem:[%s1 + $0x288] sm:$0xff]
      %v295 = vld [vmem:[%s1 + $0x290] sm:$0xf]
      %v296 = vld [vmem:[%s1 + $0x294] sm:$0xff]
      %v297 = vld [vmem:[%s1 + $0x29c] sm:$0xf]
      %v298 = vld [vmem:[%s1 + $0x2a0] sm:$0xff]
      %v299 = vld [vmem:[%s1 + $0x2a8] sm:$0xf]
      %v300 = vld [vmem:[%s1 + $0x2ac] sm:$0xff]
      %v301 = vld [vmem:[%s1 + $0x2b4] sm:$0xf]
      %v302 = vld [vmem:[%s1 + $0x2b8] sm:$0xff]
      %v303 = vld [vmem:[%s1 + $0x2c0] sm:$0xf]
      %v304 = vld [vmem:[%s1 + $0x2c4] sm:$0xff]
      %v305 = vld [vmem:[%s1 + $0x2cc] sm:$0xf]
      %v306 = vld [vmem:[%s1 + $0x2d0] sm:$0xff]
      %v307 = vld [vmem:[%s1 + $0x2d8] sm:$0xf]
      %v308 = vld [vmem:[%s1 + $0x2dc] sm:$0xff]
      %v309 = vld [vmem:[%s1 + $0x2e4] sm:$0xf]
      %v310 = vld [vmem:[%s1 + $0x2e8] sm:$0xff]
      %v311 = vld [vmem:[%s1 + $0x2f0] sm:$0xf]
      %v312 = vld [vmem:[%s1 + $0x2f4] sm:$0xff]
      %v313 = vld [vmem:[%s1 + $0x2fc] sm:$0xf]
      %v314 = vld [vmem:[%s2] sm:$0x7]
      %v316 = vlaneseq
      %v317 = vshrl.u32 %v316, 7
      %v318 = vsub.s32 0, %v317
      %v319 = vrot.slane %v314, %v318
      %v320 = vlaneseq
      %v321 = vshrl.u32 %v320, 7
      %v322 = vsub.s32 1, %v321
      %v323 = vrot.slane %v314, %v322
      %v324 = vlaneseq
      %v325 = vshrl.u32 %v324, 7
      %v326 = vsub.s32 2, %v325
      %v327 = vrot.slane %v314, %v326
      %v339 = vunpack.c.l.b16 %v178
      %v340 = vunpack.c.h.b16 %v178
      %v341 = vunpack.c.l.b16 %v179
      %v342 = vunpack.c.h.b16 %v179
      %v343 = vunpack.c.l.b16 %v180
      %v344 = vunpack.c.h.b16 %v180
      %v345 = vunpack.c.l.b16 %v181
      %v346 = vunpack.c.h.b16 %v181
      %v347 = vunpack.c.l.b16 %v182
      %v348 = vunpack.c.h.b16 %v182
      %v349 = vunpack.c.l.b16 %v183
      %v350 = vunpack.c.h.b16 %v183
      %v351 = vunpack.c.l.b16 %v184
      %v352 = vunpack.c.h.b16 %v184
      %v353 = vunpack.c.l.b16 %v185
      %v354 = vunpack.c.h.b16 %v185
      %v355 = vpack.c.b16 %v343, %v339
      %v356 = vpack.c.b16 %v344, %v340
      %v357 = vpack.c.b16 %v345, %v341
      %v358 = vpack.c.b16 %v346, %v342
      %v359 = vpack.c.b16 %v351, %v347
      %v360 = vpack.c.b16 %v352, %v348
      %v361 = vpack.c.b16 %v353, %v349
      %v362 = vpack.c.b16 %v354, %v350
      %v499 = vunpack.c.l.b16 %v186
      %v500 = vunpack.c.h.b16 %v186
      %v501 = vunpack.c.l.b16 %v187
      %v502 = vunpack.c.l.b16 %v188
      %v503 = vunpack.c.h.b16 %v188
      %v504 = vunpack.c.l.b16 %v189
      %v505 = vunpack.c.l.b16 %v190
      %v506 = vunpack.c.h.b16 %v190
      %v507 = vunpack.c.l.b16 %v191
      %v508 = vunpack.c.l.b16 %v192
      %v509 = vunpack.c.h.b16 %v192
      %v510 = vunpack.c.l.b16 %v193
      %v511 = vunpack.c.l.b16 %v194
      %v512 = vunpack.c.h.b16 %v194
      %v513 = vunpack.c.l.b16 %v195
      %v514 = vunpack.c.l.b16 %v196
      %v515 = vunpack.c.h.b16 %v196
      %v516 = vunpack.c.l.b16 %v197
      %v517 = vunpack.c.l.b16 %v198
      %v518 = vunpack.c.h.b16 %v198
      %v519 = vunpack.c.l.b16 %v199
      %v520 = vunpack.c.l.b16 %v200
      %v521 = vunpack.c.h.b16 %v200
      %v522 = vunpack.c.l.b16 %v201
      %v523 = vunpack.c.l.b16 %v202
      %v524 = vunpack.c.h.b16 %v202
      %v525 = vunpack.c.l.b16 %v203
      %v526 = vunpack.c.l.b16 %v204
      %v527 = vunpack.c.h.b16 %v204
      %v528 = vunpack.c.l.b16 %v205
      %v529 = vunpack.c.l.b16 %v206
      %v530 = vunpack.c.h.b16 %v206
      %v531 = vunpack.c.l.b16 %v207
      %v532 = vunpack.c.l.b16 %v208
      %v533 = vunpack.c.h.b16 %v208
      %v534 = vunpack.c.l.b16 %v209
      %v535 = vunpack.c.l.b16 %v210
      %v536 = vunpack.c.h.b16 %v210
      %v537 = vunpack.c.l.b16 %v211
      %v538 = vunpack.c.l.b16 %v212
      %v539 = vunpack.c.h.b16 %v212
      %v540 = vunpack.c.l.b16 %v213
      %v541 = vunpack.c.l.b16 %v214
      %v542 = vunpack.c.h.b16 %v214
      %v543 = vunpack.c.l.b16 %v215
      %v544 = vunpack.c.l.b16 %v216
      %v545 = vunpack.c.h.b16 %v216
      %v546 = vunpack.c.l.b16 %v217
      %v547 = vunpack.c.l.b16 %v218
      %v548 = vunpack.c.h.b16 %v218
      %v549 = vunpack.c.l.b16 %v219
      %v550 = vunpack.c.l.b16 %v220
      %v551 = vunpack.c.h.b16 %v220
      %v552 = vunpack.c.l.b16 %v221
      %v553 = vunpack.c.l.b16 %v222
      %v554 = vunpack.c.h.b16 %v222
      %v555 = vunpack.c.l.b16 %v223
      %v556 = vunpack.c.l.b16 %v224
      %v557 = vunpack.c.h.b16 %v224
      %v558 = vunpack.c.l.b16 %v225
      %v559 = vunpack.c.l.b16 %v226
      %v560 = vunpack.c.h.b16 %v226
      %v561 = vunpack.c.l.b16 %v227
      %v562 = vunpack.c.l.b16 %v228
      %v563 = vunpack.c.h.b16 %v228
      %v564 = vunpack.c.l.b16 %v229
      %v565 = vunpack.c.l.b16 %v230
      %v566 = vunpack.c.h.b16 %v230
      %v567 = vunpack.c.l.b16 %v231
      %v568 = vunpack.c.l.b16 %v232
      %v569 = vunpack.c.h.b16 %v232
      %v570 = vunpack.c.l.b16 %v233
      %v571 = vunpack.c.l.b16 %v234
      %v572 = vunpack.c.h.b16 %v234
      %v573 = vunpack.c.l.b16 %v235
      %v574 = vunpack.c.l.b16 %v236
      %v575 = vunpack.c.h.b16 %v236
      %v576 = vunpack.c.l.b16 %v237
      %v577 = vunpack.c.l.b16 %v238
      %v578 = vunpack.c.h.b16 %v238
      %v579 = vunpack.c.l.b16 %v239
      %v580 = vunpack.c.l.b16 %v240
      %v581 = vunpack.c.h.b16 %v240
      %v582 = vunpack.c.l.b16 %v241
      %v583 = vunpack.c.l.b16 %v242
      %v584 = vunpack.c.h.b16 %v242
      %v585 = vunpack.c.l.b16 %v243
      %v586 = vunpack.c.l.b16 %v244
      %v587 = vunpack.c.h.b16 %v244
      %v588 = vunpack.c.l.b16 %v245
      %v589 = vunpack.c.l.b16 %v246
      %v590 = vunpack.c.h.b16 %v246
      %v591 = vunpack.c.l.b16 %v247
      %v592 = vunpack.c.l.b16 %v248
      %v593 = vunpack.c.h.b16 %v248
      %v594 = vunpack.c.l.b16 %v249
      %v595 = vunpack.c.l.b16 %v250
      %v596 = vunpack.c.h.b16 %v250
      %v597 = vunpack.c.l.b16 %v251
      %v598 = vunpack.c.l.b16 %v252
      %v599 = vunpack.c.h.b16 %v252
      %v600 = vunpack.c.l.b16 %v253
      %v601 = vunpack.c.l.b16 %v254
      %v602 = vunpack.c.h.b16 %v254
      %v603 = vunpack.c.l.b16 %v255
      %v604 = vunpack.c.l.b16 %v256
      %v605 = vunpack.c.h.b16 %v256
      %v606 = vunpack.c.l.b16 %v257
      %v607 = vunpack.c.l.b16 %v258
      %v608 = vunpack.c.h.b16 %v258
      %v609 = vunpack.c.l.b16 %v259
      %v610 = vunpack.c.l.b16 %v260
      %v611 = vunpack.c.h.b16 %v260
      %v612 = vunpack.c.l.b16 %v261
      %v613 = vunpack.c.l.b16 %v262
      %v614 = vunpack.c.h.b16 %v262
      %v615 = vunpack.c.l.b16 %v263
      %v616 = vunpack.c.l.b16 %v264
      %v617 = vunpack.c.h.b16 %v264
      %v618 = vunpack.c.l.b16 %v265
      %v619 = vunpack.c.l.b16 %v266
      %v620 = vunpack.c.h.b16 %v266
      %v621 = vunpack.c.l.b16 %v267
      %v622 = vunpack.c.l.b16 %v268
      %v623 = vunpack.c.h.b16 %v268
      %v624 = vunpack.c.l.b16 %v269
      %v625 = vunpack.c.l.b16 %v270
      %v626 = vunpack.c.h.b16 %v270
      %v627 = vunpack.c.l.b16 %v271
      %v628 = vunpack.c.l.b16 %v272
      %v629 = vunpack.c.h.b16 %v272
      %v630 = vunpack.c.l.b16 %v273
      %v631 = vunpack.c.l.b16 %v274
      %v632 = vunpack.c.h.b16 %v274
      %v633 = vunpack.c.l.b16 %v275
      %v634 = vunpack.c.l.b16 %v276
      %v635 = vunpack.c.h.b16 %v276
      %v636 = vunpack.c.l.b16 %v277
      %v637 = vunpack.c.l.b16 %v278
      %v638 = vunpack.c.h.b16 %v278
      %v639 = vunpack.c.l.b16 %v279
      %v640 = vunpack.c.l.b16 %v280
      %v641 = vunpack.c.h.b16 %v280
      %v642 = vunpack.c.l.b16 %v281
      %v643 = vunpack.c.l.b16 %v282
      %v644 = vunpack.c.h.b16 %v282
      %v645 = vunpack.c.l.b16 %v283
      %v646 = vunpack.c.l.b16 %v284
      %v647 = vunpack.c.h.b16 %v284
      %v648 = vunpack.c.l.b16 %v285
      %v649 = vunpack.c.l.b16 %v286
      %v650 = vunpack.c.h.b16 %v286
      %v651 = vunpack.c.l.b16 %v287
      %v652 = vunpack.c.l.b16 %v288
      %v653 = vunpack.c.h.b16 %v288
      %v654 = vunpack.c.l.b16 %v289
      %v655 = vunpack.c.l.b16 %v290
      %v656 = vunpack.c.h.b16 %v290
      %v657 = vunpack.c.l.b16 %v291
      %v658 = vunpack.c.l.b16 %v292
      %v659 = vunpack.c.h.b16 %v292
      %v660 = vunpack.c.l.b16 %v293
      %v661 = vunpack.c.l.b16 %v294
      %v662 = vunpack.c.h.b16 %v294
      %v663 = vunpack.c.l.b16 %v295
      %v664 = vunpack.c.l.b16 %v296
      %v665 = vunpack.c.h.b16 %v296
      %v666 = vunpack.c.l.b16 %v297
      %v667 = vunpack.c.l.b16 %v298
      %v668 = vunpack.c.h.b16 %v298
      %v669 = vunpack.c.l.b16 %v299
      %v670 = vunpack.c.l.b16 %v300
      %v671 = vunpack.c.h.b16 %v300
      %v672 = vunpack.c.l.b16 %v301
      %v673 = vunpack.c.l.b16 %v302
      %v674 = vunpack.c.h.b16 %v302
      %v675 = vunpack.c.l.b16 %v303
      %v676 = vunpack.c.l.b16 %v304
      %v677 = vunpack.c.h.b16 %v304
      %v678 = vunpack.c.l.b16 %v305
      %v679 = vunpack.c.l.b16 %v306
      %v680 = vunpack.c.h.b16 %v306
      %v681 = vunpack.c.l.b16 %v307
      %v682 = vunpack.c.l.b16 %v308
      %v683 = vunpack.c.h.b16 %v308
      %v684 = vunpack.c.l.b16 %v309
      %v685 = vunpack.c.l.b16 %v310
      %v686 = vunpack.c.h.b16 %v310
      %v687 = vunpack.c.l.b16 %v311
      %v688 = vunpack.c.l.b16 %v312
      %v689 = vunpack.c.h.b16 %v312
      %v690 = vunpack.c.l.b16 %v313
      %v691 = vpack.c.b16 %v502, %v499
      %v692 = vpack.c.b16 %v503, %v500
      %v693 = vpack.c.b16 %v504, %v501
      %v694 = vpack.c.b16 %v508, %v505
      %v695 = vpack.c.b16 %v509, %v506
      %v696 = vpack.c.b16 %v510, %v507
      %v697 = vpack.c.b16 %v514, %v511
      %v698 = vpack.c.b16 %v515, %v512
      %v699 = vpack.c.b16 %v516, %v513
      %v700 = vpack.c.b16 %v520, %v517
      %v701 = vpack.c.b16 %v521, %v518
      %v702 = vpack.c.b16 %v522, %v519
      %v703 = vpack.c.b16 %v526, %v523
      %v704 = vpack.c.b16 %v527, %v524
      %v705 = vpack.c.b16 %v528, %v525
      %v706 = vpack.c.b16 %v532, %v529
      %v707 = vpack.c.b16 %v533, %v530
      %v708 = vpack.c.b16 %v534, %v531
      %v709 = vpack.c.b16 %v538, %v535
      %v710 = vpack.c.b16 %v539, %v536
      %v711 = vpack.c.b16 %v540, %v537
      %v712 = vpack.c.b16 %v544, %v541
      %v713 = vpack.c.b16 %v545, %v542
      %v714 = vpack.c.b16 %v546, %v543
      %v715 = vpack.c.b16 %v550, %v547
      %v716 = vpack.c.b16 %v551, %v548
      %v717 = vpack.c.b16 %v552, %v549
      %v718 = vpack.c.b16 %v556, %v553
      %v719 = vpack.c.b16 %v557, %v554
      %v720 = vpack.c.b16 %v558, %v555
      %v721 = vpack.c.b16 %v562, %v559
      %v722 = vpack.c.b16 %v563, %v560
      %v723 = vpack.c.b16 %v564, %v561
      %v724 = vpack.c.b16 %v568, %v565
      %v725 = vpack.c.b16 %v569, %v566
      %v726 = vpack.c.b16 %v570, %v567
      %v727 = vpack.c.b16 %v574, %v571
      %v728 = vpack.c.b16 %v575, %v572
      %v729 = vpack.c.b16 %v576, %v573
      %v730 = vpack.c.b16 %v580, %v577
      %v731 = vpack.c.b16 %v581, %v578
      %v732 = vpack.c.b16 %v582, %v579
      %v733 = vpack.c.b16 %v586, %v583
      %v734 = vpack.c.b16 %v587, %v584
      %v735 = vpack.c.b16 %v588, %v585
      %v736 = vpack.c.b16 %v592, %v589
      %v737 = vpack.c.b16 %v593, %v590
      %v738 = vpack.c.b16 %v594, %v591
      %v739 = vpack.c.b16 %v598, %v595
      %v740 = vpack.c.b16 %v599, %v596
      %v741 = vpack.c.b16 %v600, %v597
      %v742 = vpack.c.b16 %v604, %v601
      %v743 = vpack.c.b16 %v605, %v602
      %v744 = vpack.c.b16 %v606, %v603
      %v745 = vpack.c.b16 %v610, %v607
      %v746 = vpack.c.b16 %v611, %v608
      %v747 = vpack.c.b16 %v612, %v609
      %v748 = vpack.c.b16 %v616, %v613
      %v749 = vpack.c.b16 %v617, %v614
      %v750 = vpack.c.b16 %v618, %v615
      %v751 = vpack.c.b16 %v622, %v619
      %v752 = vpack.c.b16 %v623, %v620
      %v753 = vpack.c.b16 %v624, %v621
      %v754 = vpack.c.b16 %v628, %v625
      %v755 = vpack.c.b16 %v629, %v626
      %v756 = vpack.c.b16 %v630, %v627
      %v757 = vpack.c.b16 %v634, %v631
      %v758 = vpack.c.b16 %v635, %v632
      %v759 = vpack.c.b16 %v636, %v633
      %v760 = vpack.c.b16 %v640, %v637
      %v761 = vpack.c.b16 %v641, %v638
      %v762 = vpack.c.b16 %v642, %v639
      %v763 = vpack.c.b16 %v646, %v643
      %v764 = vpack.c.b16 %v647, %v644
      %v765 = vpack.c.b16 %v648, %v645
      %v766 = vpack.c.b16 %v652, %v649
      %v767 = vpack.c.b16 %v653, %v650
      %v768 = vpack.c.b16 %v654, %v651
      %v769 = vpack.c.b16 %v658, %v655
      %v770 = vpack.c.b16 %v659, %v656
      %v771 = vpack.c.b16 %v660, %v657
      %v772 = vpack.c.b16 %v664, %v661
      %v773 = vpack.c.b16 %v665, %v662
      %v774 = vpack.c.b16 %v666, %v663
      %v775 = vpack.c.b16 %v670, %v667
      %v776 = vpack.c.b16 %v671, %v668
      %v777 = vpack.c.b16 %v672, %v669
      %v778 = vpack.c.b16 %v676, %v673
      %v779 = vpack.c.b16 %v677, %v674
      %v780 = vpack.c.b16 %v678, %v675
      %v781 = vpack.c.b16 %v682, %v679
      %v782 = vpack.c.b16 %v683, %v680
      %v783 = vpack.c.b16 %v684, %v681
      %v784 = vpack.c.b16 %v688, %v685
      %v785 = vpack.c.b16 %v689, %v686
      %v786 = vpack.c.b16 %v690, %v687
      %883 = vmatprep.subr.bf16.mxu0 %v692
      %884 = vmatpush1.bf16.msra.mxu0 %v691
      %885 = vmatprep.subr.bf16.mxu0 %v695
      %886 = vmatpush1.bf16.msra.mxu0 %v694
      %887 = vmatprep.subr.bf16.mxu0 %v698
      %888 = vmatpush1.bf16.msra.mxu0 %v697
      %889 = vmatprep.subr.bf16.mxu0 %v701
      %890 = vmatpush1.bf16.msra.mxu0 %v700
      %891 = vmatprep.subr.bf16.mxu0 %v704
      %892 = vmatpush1.bf16.msra.mxu0 %v703
      %893 = vmatprep.subr.bf16.mxu0 %v707
      %894 = vmatpush1.bf16.msra.mxu0 %v706
      %895 = vmatprep.subr.bf16.mxu0 %v710
      %896 = vmatpush1.bf16.msra.mxu0 %v709
      %897 = vmatprep.subr.bf16.mxu0 %v713
      %898 = vmatpush1.bf16.msra.mxu0 %v712
      %899 = vmatprep.subr.bf16.mxu0 %v716
      %900 = vmatpush1.bf16.msra.mxu0 %v715
      %901 = vmatprep.subr.bf16.mxu0 %v719
      %902 = vmatpush1.bf16.msra.mxu0 %v718
      %903 = vmatprep.subr.bf16.mxu0 %v722
      %904 = vmatpush1.bf16.msra.mxu0 %v721
      %905 = vmatprep.subr.bf16.mxu0 %v725
      %906 = vmatpush1.bf16.msra.mxu0 %v724
      %907 = vmatprep.subr.bf16.mxu0 %v728
      %908 = vmatpush1.bf16.msra.mxu0 %v727
      %909 = vmatprep.subr.bf16.mxu0 %v731
      %910 = vmatpush1.bf16.msra.mxu0 %v730
      %911 = vmatprep.subr.bf16.mxu0 %v734
      %912 = vmatpush1.bf16.msra.mxu0 %v733
      %913 = vmatprep.subr.bf16.mxu0 %v737
      %914 = vmatpush1.bf16.msra.mxu0 %v736
      %915 = vmatprep.mubr.bf16.mxu0 %v356
      %916 = vmatmul.mubr.bf16.gmra.mrb[0].mxu0 %v355
      %v917 = vpop.f32.mrb[0].mxu0
      %v918 = vadd.f32 %v319, %v917
      %v919 = vpop.f32.mrb[0].mxu0
      %v920 = vadd.f32 %v323, %v919
      %v921 = vpop.f32.mrb[0].mxu0
      %v922 = vadd.f32 %v319, %v921
      %v923 = vpop.f32.mrb[0].mxu0
      %v924 = vadd.f32 %v323, %v923
      %925 = vmatprep.mubr.bf16.mxu0 %v360
      %926 = vmatmul.mubr.bf16.gmra.mrb[0].mxu0 %v359
      %v927 = vpop.f32.mrb[0].mxu0
      %v928 = vadd.f32 %v319, %v927
      %v929 = vpop.f32.mrb[0].mxu0
      %v930 = vadd.f32 %v323, %v929
      %v931 = vpop.f32.mrb[0].mxu0
      %v932 = vadd.f32 %v319, %v931
      %v933 = vpop.f32.mrb[0].mxu0
      %v934 = vadd.f32 %v323, %v933
      %935 = vdwg.mxu0
      %936 = vmatprep.subr.bf16.mxu0 %v740
      %937 = vmatpush1.bf16.msra.mxu0 %v739
      %938 = vmatprep.subr.bf16.mxu0 %v743
      %939 = vmatpush1.bf16.msra.mxu0 %v742
      %940 = vmatprep.subr.bf16.mxu0 %v746
      %941 = vmatpush1.bf16.msra.mxu0 %v745
      %942 = vmatprep.subr.bf16.mxu0 %v749
      %943 = vmatpush1.bf16.msra.mxu0 %v748
      %944 = vmatprep.subr.bf16.mxu0 %v752
      %945 = vmatpush1.bf16.msra.mxu0 %v751
      %946 = vmatprep.subr.bf16.mxu0 %v755
      %947 = vmatpush1.bf16.msra.mxu0 %v754
      %948 = vmatprep.subr.bf16.mxu0 %v758
      %949 = vmatpush1.bf16.msra.mxu0 %v757
      %950 = vmatprep.subr.bf16.mxu0 %v761
      %951 = vmatpush1.bf16.msra.mxu0 %v760
      %952 = vmatprep.subr.bf16.mxu0 %v764
      %953 = vmatpush1.bf16.msra.mxu0 %v763
      %954 = vmatprep.subr.bf16.mxu0 %v767
      %955 = vmatpush1.bf16.msra.mxu0 %v766
      %956 = vmatprep.subr.bf16.mxu0 %v770
      %957 = vmatpush1.bf16.msra.mxu0 %v769
      %958 = vmatprep.subr.bf16.mxu0 %v773
      %959 = vmatpush1.bf16.msra.mxu0 %v772
      %960 = vmatprep.subr.bf16.mxu0 %v776
      %961 = vmatpush1.bf16.msra.mxu0 %v775
      %962 = vmatprep.subr.bf16.mxu0 %v779
      %963 = vmatpush1.bf16.msra.mxu0 %v778
      %964 = vmatprep.subr.bf16.mxu0 %v782
      %965 = vmatpush1.bf16.msra.mxu0 %v781
      %966 = vmatprep.subr.bf16.mxu0 %v785
      %967 = vmatpush1.bf16.msra.mxu0 %v784
      %968 = vmatprep.mubr.bf16.mxu0 %v358
      %969 = vmatmul.mubr.bf16.gmra.mrb[0].mxu0 %v357
      %v970 = vpop.f32.mrb[0].mxu0
      %v971 = vadd.f32 %v918, %v970
      %v972 = vpop.f32.mrb[0].mxu0
      %v973 = vadd.f32 %v920, %v972
      %v974 = vpop.f32.mrb[0].mxu0
      %v975 = vadd.f32 %v922, %v974
      %v976 = vpop.f32.mrb[0].mxu0
      %v977 = vadd.f32 %v924, %v976
      %978 = vmatprep.mubr.bf16.mxu0 %v362
      %979 = vmatmul.mubr.bf16.gmra.mrb[0].mxu0 %v361
      %v980 = vpop.f32.mrb[0].mxu0
      %v981 = vadd.f32 %v928, %v980
      %v982 = vpop.f32.mrb[0].mxu0
      %v983 = vadd.f32 %v930, %v982
      %v984 = vpop.f32.mrb[0].mxu0
      %v985 = vadd.f32 %v932, %v984
      %v986 = vpop.f32.mrb[0].mxu0
      %v987 = vadd.f32 %v934, %v986
      %988 = vdwg.mxu0
      %989 = vmatprep.subr.bf16.mxu0 0
      %990 = vmatpush1.bf16.msra.mxu0 %v693
      %991 = vmatprep.subr.bf16.mxu0 0
      %992 = vmatpush1.bf16.msra.mxu0 %v696
      %993 = vmatprep.subr.bf16.mxu0 0
      %994 = vmatpush1.bf16.msra.mxu0 %v699
      %995 = vmatprep.subr.bf16.mxu0 0
      %996 = vmatpush1.bf16.msra.mxu0 %v702
      %997 = vmatprep.subr.bf16.mxu0 0
      %998 = vmatpush1.bf16.msra.mxu0 %v705
      %999 = vmatprep.subr.bf16.mxu0 0
      %1000 = vmatpush1.bf16.msra.mxu0 %v708
      %1001 = vmatprep.subr.bf16.mxu0 0
      %1002 = vmatpush1.bf16.msra.mxu0 %v711
      %1003 = vmatprep.subr.bf16.mxu0 0
      %1004 = vmatpush1.bf16.msra.mxu0 %v714
      %1005 = vmatprep.subr.bf16.mxu0 0
      %1006 = vmatpush1.bf16.msra.mxu0 %v717
      %1007 = vmatprep.subr.bf16.mxu0 0
      %1008 = vmatpush1.bf16.msra.mxu0 %v720
      %1009 = vmatprep.subr.bf16.mxu0 0
      %1010 = vmatpush1.bf16.msra.mxu0 %v723
      %1011 = vmatprep.subr.bf16.mxu0 0
      %1012 = vmatpush1.bf16.msra.mxu0 %v726
      %1013 = vmatprep.subr.bf16.mxu0 0
      %1014 = vmatpush1.bf16.msra.mxu0 %v729
      %1015 = vmatprep.subr.bf16.mxu0 0
      %1016 = vmatpush1.bf16.msra.mxu0 %v732
      %1017 = vmatprep.subr.bf16.mxu0 0
      %1018 = vmatpush1.bf16.msra.mxu0 %v735
      %1019 = vmatprep.subr.bf16.mxu0 0
      %1020 = vmatpush1.bf16.msra.mxu0 %v738
      %1021 = vmatprep.mubr.bf16.mxu0 %v356
      %1022 = vmatmul.mubr.bf16.gmra.mrb[0].mxu0 %v355
      %v1023 = vpop.f32.mrb[0].mxu0
      %v1024 = vadd.f32 %v327, %v1023
      %v1025 = vpop.f32.mrb[0].mxu0
      %v1026 = vpop.f32.mrb[0].mxu0
      %v1027 = vadd.f32 %v327, %v1026
      %v1028 = vpop.f32.mrb[0].mxu0
      %1029 = vmatprep.mubr.bf16.mxu0 %v360
      %1030 = vmatmul.mubr.bf16.gmra.mrb[0].mxu0 %v359
      %v1031 = vpop.f32.mrb[0].mxu0
      %v1032 = vadd.f32 %v327, %v1031
      %v1033 = vpop.f32.mrb[0].mxu0
      %v1034 = vpop.f32.mrb[0].mxu0
      %v1035 = vadd.f32 %v327, %v1034
      %v1036 = vpop.f32.mrb[0].mxu0
      %1037 = vdwg.mxu0
      %1038 = vmatprep.subr.bf16.mxu0 0
      %1039 = vmatpush1.bf16.msra.mxu0 %v741
      %1040 = vmatprep.subr.bf16.mxu0 0
      %1041 = vmatpush1.bf16.msra.mxu0 %v744
      %1042 = vmatprep.subr.bf16.mxu0 0
      %1043 = vmatpush1.bf16.msra.mxu0 %v747
      %1044 = vmatprep.subr.bf16.mxu0 0
      %1045 = vmatpush1.bf16.msra.mxu0 %v750
      %1046 = vmatprep.subr.bf16.mxu0 0
      %1047 = vmatpush1.bf16.msra.mxu0 %v753
      %1048 = vmatprep.subr.bf16.mxu0 0
      %1049 = vmatpush1.bf16.msra.mxu0 %v756
      %1050 = vmatprep.subr.bf16.mxu0 0
      %1051 = vmatpush1.bf16.msra.mxu0 %v759
      %1052 = vmatprep.subr.bf16.mxu0 0
      %1053 = vmatpush1.bf16.msra.mxu0 %v762
      %1054 = vmatprep.subr.bf16.mxu0 0
      %1055 = vmatpush1.bf16.msra.mxu0 %v765
      %1056 = vmatprep.subr.bf16.mxu0 0
      %1057 = vmatpush1.bf16.msra.mxu0 %v768
      %1058 = vmatprep.subr.bf16.mxu0 0
      %1059 = vmatpush1.bf16.msra.mxu0 %v771
      %1060 = vmatprep.subr.bf16.mxu0 0
      %1061 = vmatpush1.bf16.msra.mxu0 %v774
      %1062 = vmatprep.subr.bf16.mxu0 0
      %1063 = vmatpush1.bf16.msra.mxu0 %v777
      %1064 = vmatprep.subr.bf16.mxu0 0
      %1065 = vmatpush1.bf16.msra.mxu0 %v780
      %1066 = vmatprep.subr.bf16.mxu0 0
      %1067 = vmatpush1.bf16.msra.mxu0 %v783
      %1068 = vmatprep.subr.bf16.mxu0 0
      %1069 = vmatpush1.bf16.msra.mxu0 %v786
      %1070 = vmatprep.mubr.bf16.mxu0 %v358
      %1071 = vmatmul.mubr.bf16.gmra.mrb[0].mxu0 %v357
      %v1072 = vpop.f32.mrb[0].mxu0
      %v1073 = vadd.f32 %v1024, %v1072
      %v1074 = vpop.f32.mrb[0].mxu0
      %v1075 = vpop.f32.mrb[0].mxu0
      %v1076 = vadd.f32 %v1027, %v1075
      %v1077 = vpop.f32.mrb[0].mxu0
      %1078 = vmatprep.mubr.bf16.mxu0 %v362
      %1079 = vmatmul.mubr.bf16.gmra.mrb[0].mxu0 %v361
      %v1080 = vpop.f32.mrb[0].mxu0
      %v1081 = vadd.f32 %v1032, %v1080
      %v1082 = vpop.f32.mrb[0].mxu0
      %v1083 = vpop.f32.mrb[0].mxu0
      %v1084 = vadd.f32 %v1035, %v1083
      %v1085 = vpop.f32.mrb[0].mxu0
      %1086 = vdwg.mxu0
      %v1087 = vmax.f32 %v971, 0.0
      %v1088 = vmax.f32 %v973, 0.0
      %v1089 = vmax.f32 %v1073, 0.0
      %v1090 = vmax.f32 %v975, 0.0
      %v1091 = vmax.f32 %v977, 0.0
      %v1092 = vmax.f32 %v1076, 0.0
      %v1093 = vmax.f32 %v981, 0.0
      %v1094 = vmax.f32 %v983, 0.0
      %v1095 = vmax.f32 %v1081, 0.0
      %v1096 = vmax.f32 %v985, 0.0
      %v1097 = vmax.f32 %v987, 0.0
      %v1098 = vmax.f32 %v1084, 0.0
      %v1099 = vpack.c.bf16 %v1090, %v1087
      %v1100 = vpack.c.bf16 %v1091, %v1088
      %v1101 = vpack.c.bf16 %v1092, %v1089
      %v1102 = vpack.c.bf16 %v1096, %v1093
      %v1103 = vpack.c.bf16 %v1097, %v1094
      %v1104 = vpack.c.bf16 %v1098, %v1095
      %v1105 = vld [vmem:[%s1 + $0x300] sm:$0xff]
      %v1106 = vld [vmem:[%s1 + $0x308] sm:$0xf]
      %v1107 = vld [vmem:[%s1 + $0x30c] sm:$0xff]
      %v1108 = vld [vmem:[%s1 + $0x314] sm:$0xf]
      %v1109 = vld [vmem:[%s1 + $0x318] sm:$0xff]
      %v1110 = vld [vmem:[%s1 + $0x320] sm:$0xf]
      %v1111 = vld [vmem:[%s1 + $0x324] sm:$0xff]
      %v1112 = vld [vmem:[%s1 + $0x32c] sm:$0xf]
      %v1113 = vld [vmem:[%s1 + $0x330] sm:$0xff]
      %v1114 = vld [vmem:[%s1 + $0x338] sm:$0xf]
      %v1115 = vld [vmem:[%s1 + $0x33c] sm:$0xff]
      %v1116 = vld [vmem:[%s1 + $0x344] sm:$0xf]
      %v1117 = vld [vmem:[%s1 + $0x348] sm:$0xff]
      %v1118 = vld [vmem:[%s1 + $0x350] sm:$0xf]
      %v1119 = vld [vmem:[%s1 + $0x354] sm:$0xff]
      %v1120 = vld [vmem:[%s1 + $0x35c] sm:$0xf]
      %v1121 = vld [vmem:[%s1 + $0x360] sm:$0xff]
      %v1122 = vld [vmem:[%s1 + $0x368] sm:$0xf]
      %v1123 = vld [vmem:[%s1 + $0x36c] sm:$0xff]
      %v1124 = vld [vmem:[%s1 + $0x374] sm:$0xf]
      %v1125 = vld [vmem:[%s1 + $0x378] sm:$0xff]
      %v1126 = vld [vmem:[%s1 + $0x380] sm:$0xf]
      %v1127 = vld [vmem:[%s1 + $0x384] sm:$0xff]
      %v1128 = vld [vmem:[%s1 + $0x38c] sm:$0xf]
      %v1129 = vld [vmem:[%s1 + $0x390] sm:$0xff]
      %v1130 = vld [vmem:[%s1 + $0x398] sm:$0xf]
      %v1131 = vld [vmem:[%s1 + $0x39c] sm:$0xff]
      %v1132 = vld [vmem:[%s1 + $0x3a4] sm:$0xf]
      %v1133 = vld [vmem:[%s1 + $0x3a8] sm:$0xff]
      %v1134 = vld [vmem:[%s1 + $0x3b0] sm:$0xf]
      %v1135 = vld [vmem:[%s1 + $0x3b4] sm:$0xff]
      %v1136 = vld [vmem:[%s1 + $0x3bc] sm:$0xf]
      %v1137 = vld [vmem:[%s1 + $0x3c0] sm:$0xff]
      %v1138 = vld [vmem:[%s1 + $0x3c8] sm:$0xf]
      %v1139 = vld [vmem:[%s1 + $0x3cc] sm:$0xff]
      %v1140 = vld [vmem:[%s1 + $0x3d4] sm:$0xf]
      %v1141 = vld [vmem:[%s1 + $0x3d8] sm:$0xff]
      %v1142 = vld [vmem:[%s1 + $0x3e0] sm:$0xf]
      %v1143 = vld [vmem:[%s1 + $0x3e4] sm:$0xff]
      %v1144 = vld [vmem:[%s1 + $0x3ec] sm:$0xf]
      %v1145 = vld [vmem:[%s1 + $0x3f0] sm:$0xff]
      %v1146 = vld [vmem:[%s1 + $0x3f8] sm:$0xf]
      %v1147 = vld [vmem:[%s1 + $0x3fc] sm:$0xff]
      %v1148 = vld [vmem:[%s1 + $0x404] sm:$0xf]
      %v1149 = vld [vmem:[%s1 + $0x408] sm:$0xff]
      %v1150 = vld [vmem:[%s1 + $0x410] sm:$0xf]
      %v1151 = vld [vmem:[%s1 + $0x414] sm:$0xff]
      %v1152 = vld [vmem:[%s1 + $0x41c] sm:$0xf]
      %v1153 = vld [vmem:[%s1 + $0x420] sm:$0xff]
      %v1154 = vld [vmem:[%s1 + $0x428] sm:$0xf]
      %v1155 = vld [vmem:[%s1 + $0x42c] sm:$0xff]
      %v1156 = vld [vmem:[%s1 + $0x434] sm:$0xf]
      %v1157 = vld [vmem:[%s1 + $0x438] sm:$0xff]
      %v1158 = vld [vmem:[%s1 + $0x440] sm:$0xf]
      %v1159 = vld [vmem:[%s1 + $0x444] sm:$0xff]
      %v1160 = vld [vmem:[%s1 + $0x44c] sm:$0xf]
      %v1161 = vld [vmem:[%s1 + $0x450] sm:$0xff]
      %v1162 = vld [vmem:[%s1 + $0x458] sm:$0xf]
      %v1163 = vld [vmem:[%s1 + $0x45c] sm:$0xff]
      %v1164 = vld [vmem:[%s1 + $0x464] sm:$0xf]
      %v1165 = vld [vmem:[%s1 + $0x468] sm:$0xff]
      %v1166 = vld [vmem:[%s1 + $0x470] sm:$0xf]
      %v1167 = vld [vmem:[%s1 + $0x474] sm:$0xff]
      %v1168 = vld [vmem:[%s1 + $0x47c] sm:$0xf]
      %v1169 = vld [vmem:[%s1 + $0x480] sm:$0xff]
      %v1170 = vld [vmem:[%s1 + $0x488] sm:$0xf]
      %v1171 = vld [vmem:[%s1 + $0x48c] sm:$0xff]
      %v1172 = vld [vmem:[%s1 + $0x494] sm:$0xf]
      %v1173 = vld [vmem:[%s1 + $0x498] sm:$0xff]
      %v1174 = vld [vmem:[%s1 + $0x4a0] sm:$0xf]
      %v1175 = vld [vmem:[%s1 + $0x4a4] sm:$0xff]
      %v1176 = vld [vmem:[%s1 + $0x4ac] sm:$0xf]
      %v1177 = vld [vmem:[%s1 + $0x4b0] sm:$0xff]
      %v1178 = vld [vmem:[%s1 + $0x4b8] sm:$0xf]
      %v1179 = vld [vmem:[%s1 + $0x4bc] sm:$0xff]
      %v1180 = vld [vmem:[%s1 + $0x4c4] sm:$0xf]
      %v1181 = vld [vmem:[%s1 + $0x4c8] sm:$0xff]
      %v1182 = vld [vmem:[%s1 + $0x4d0] sm:$0xf]
      %v1183 = vld [vmem:[%s1 + $0x4d4] sm:$0xff]
      %v1184 = vld [vmem:[%s1 + $0x4dc] sm:$0xf]
      %v1185 = vld [vmem:[%s1 + $0x4e0] sm:$0xff]
      %v1186 = vld [vmem:[%s1 + $0x4e8] sm:$0xf]
      %v1187 = vld [vmem:[%s1 + $0x4ec] sm:$0xff]
      %v1188 = vld [vmem:[%s1 + $0x4f4] sm:$0xf]
      %v1189 = vld [vmem:[%s1 + $0x4f8] sm:$0xff]
      %v1190 = vld [vmem:[%s1 + $0x500] sm:$0xf]
      %v1191 = vld [vmem:[%s1 + $0x504] sm:$0xff]
      %v1192 = vld [vmem:[%s1 + $0x50c] sm:$0xf]
      %v1193 = vld [vmem:[%s1 + $0x510] sm:$0xff]
      %v1194 = vld [vmem:[%s1 + $0x518] sm:$0xf]
      %v1195 = vld [vmem:[%s1 + $0x51c] sm:$0xff]
      %v1196 = vld [vmem:[%s1 + $0x524] sm:$0xf]
      %v1197 = vld [vmem:[%s1 + $0x528] sm:$0xff]
      %v1198 = vld [vmem:[%s1 + $0x530] sm:$0xf]
      %v1199 = vld [vmem:[%s1 + $0x534] sm:$0xff]
      %v1200 = vld [vmem:[%s1 + $0x53c] sm:$0xf]
      %v1201 = vld [vmem:[%s2 + $0x3] sm:$0x7]
      %v1203 = vlaneseq
      %v1204 = vshrl.u32 %v1203, 7
      %v1205 = vsub.s32 0, %v1204
      %v1206 = vrot.slane %v1201, %v1205
      %v1207 = vlaneseq
      %v1208 = vshrl.u32 %v1207, 7
      %v1209 = vsub.s32 1, %v1208
      %v1210 = vrot.slane %v1201, %v1209
      %v1211 = vlaneseq
      %v1212 = vshrl.u32 %v1211, 7
      %v1213 = vsub.s32 2, %v1212
      %v1214 = vrot.slane %v1201, %v1213
      %v1314 = vunpack.c.l.b16 %v1105
      %v1315 = vunpack.c.h.b16 %v1105
      %v1316 = vunpack.c.l.b16 %v1106
      %v1317 = vunpack.c.l.b16 %v1107
      %v1318 = vunpack.c.h.b16 %v1107
      %v1319 = vunpack.c.l.b16 %v1108
      %v1320 = vunpack.c.l.b16 %v1109
      %v1321 = vunpack.c.h.b16 %v1109
      %v1322 = vunpack.c.l.b16 %v1110
      %v1323 = vunpack.c.l.b16 %v1111
      %v1324 = vunpack.c.h.b16 %v1111
      %v1325 = vunpack.c.l.b16 %v1112
      %v1326 = vunpack.c.l.b16 %v1113
      %v1327 = vunpack.c.h.b16 %v1113
      %v1328 = vunpack.c.l.b16 %v1114
      %v1329 = vunpack.c.l.b16 %v1115
      %v1330 = vunpack.c.h.b16 %v1115
      %v1331 = vunpack.c.l.b16 %v1116
      %v1332 = vunpack.c.l.b16 %v1117
      %v1333 = vunpack.c.h.b16 %v1117
      %v1334 = vunpack.c.l.b16 %v1118
      %v1335 = vunpack.c.l.b16 %v1119
      %v1336 = vunpack.c.h.b16 %v1119
      %v1337 = vunpack.c.l.b16 %v1120
      %v1338 = vunpack.c.l.b16 %v1121
      %v1339 = vunpack.c.h.b16 %v1121
      %v1340 = vunpack.c.l.b16 %v1122
      %v1341 = vunpack.c.l.b16 %v1123
      %v1342 = vunpack.c.h.b16 %v1123
      %v1343 = vunpack.c.l.b16 %v1124
      %v1344 = vunpack.c.l.b16 %v1125
      %v1345 = vunpack.c.h.b16 %v1125
      %v1346 = vunpack.c.l.b16 %v1126
      %v1347 = vunpack.c.l.b16 %v1127
      %v1348 = vunpack.c.h.b16 %v1127
      %v1349 = vunpack.c.l.b16 %v1128
      %v1350 = vunpack.c.l.b16 %v1129
      %v1351 = vunpack.c.h.b16 %v1129
      %v1352 = vunpack.c.l.b16 %v1130
      %v1353 = vunpack.c.l.b16 %v1131
      %v1354 = vunpack.c.h.b16 %v1131
      %v1355 = vunpack.c.l.b16 %v1132
      %v1356 = vunpack.c.l.b16 %v1133
      %v1357 = vunpack.c.h.b16 %v1133
      %v1358 = vunpack.c.l.b16 %v1134
      %v1359 = vunpack.c.l.b16 %v1135
      %v1360 = vunpack.c.h.b16 %v1135
      %v1361 = vunpack.c.l.b16 %v1136
      %v1362 = vunpack.c.l.b16 %v1137
      %v1363 = vunpack.c.h.b16 %v1137
      %v1364 = vunpack.c.l.b16 %v1138
      %v1365 = vunpack.c.l.b16 %v1139
      %v1366 = vunpack.c.h.b16 %v1139
      %v1367 = vunpack.c.l.b16 %v1140
      %v1368 = vunpack.c.l.b16 %v1141
      %v1369 = vunpack.c.h.b16 %v1141
      %v1370 = vunpack.c.l.b16 %v1142
      %v1371 = vunpack.c.l.b16 %v1143
      %v1372 = vunpack.c.h.b16 %v1143
      %v1373 = vunpack.c.l.b16 %v1144
      %v1374 = vunpack.c.l.b16 %v1145
      %v1375 = vunpack.c.h.b16 %v1145
      %v1376 = vunpack.c.l.b16 %v1146
      %v1377 = vunpack.c.l.b16 %v1147
      %v1378 = vunpack.c.h.b16 %v1147
      %v1379 = vunpack.c.l.b16 %v1148
      %v1380 = vunpack.c.l.b16 %v1149
      %v1381 = vunpack.c.h.b16 %v1149
      %v1382 = vunpack.c.l.b16 %v1150
      %v1383 = vunpack.c.l.b16 %v1151
      %v1384 = vunpack.c.h.b16 %v1151
      %v1385 = vunpack.c.l.b16 %v1152
      %v1386 = vunpack.c.l.b16 %v1153
      %v1387 = vunpack.c.h.b16 %v1153
      %v1388 = vunpack.c.l.b16 %v1154
      %v1389 = vunpack.c.l.b16 %v1155
      %v1390 = vunpack.c.h.b16 %v1155
      %v1391 = vunpack.c.l.b16 %v1156
      %v1392 = vunpack.c.l.b16 %v1157
      %v1393 = vunpack.c.h.b16 %v1157
      %v1394 = vunpack.c.l.b16 %v1158
      %v1395 = vunpack.c.l.b16 %v1159
      %v1396 = vunpack.c.h.b16 %v1159
      %v1397 = vunpack.c.l.b16 %v1160
      %v1398 = vunpack.c.l.b16 %v1161
      %v1399 = vunpack.c.h.b16 %v1161
      %v1400 = vunpack.c.l.b16 %v1162
      %v1401 = vunpack.c.l.b16 %v1163
      %v1402 = vunpack.c.h.b16 %v1163
      %v1403 = vunpack.c.l.b16 %v1164
      %v1404 = vunpack.c.l.b16 %v1165
      %v1405 = vunpack.c.h.b16 %v1165
      %v1406 = vunpack.c.l.b16 %v1166
      %v1407 = vunpack.c.l.b16 %v1167
      %v1408 = vunpack.c.h.b16 %v1167
      %v1409 = vunpack.c.l.b16 %v1168
      %v1410 = vunpack.c.l.b16 %v1169
      %v1411 = vunpack.c.h.b16 %v1169
      %v1412 = vunpack.c.l.b16 %v1170
      %v1413 = vunpack.c.l.b16 %v1171
      %v1414 = vunpack.c.h.b16 %v1171
      %v1415 = vunpack.c.l.b16 %v1172
      %v1416 = vunpack.c.l.b16 %v1173
      %v1417 = vunpack.c.h.b16 %v1173
      %v1418 = vunpack.c.l.b16 %v1174
      %v1419 = vunpack.c.l.b16 %v1175
      %v1420 = vunpack.c.h.b16 %v1175
      %v1421 = vunpack.c.l.b16 %v1176
      %v1422 = vunpack.c.l.b16 %v1177
      %v1423 = vunpack.c.h.b16 %v1177
      %v1424 = vunpack.c.l.b16 %v1178
      %v1425 = vunpack.c.l.b16 %v1179
      %v1426 = vunpack.c.h.b16 %v1179
      %v1427 = vunpack.c.l.b16 %v1180
      %v1428 = vunpack.c.l.b16 %v1181
      %v1429 = vunpack.c.h.b16 %v1181
      %v1430 = vunpack.c.l.b16 %v1182
      %v1431 = vunpack.c.l.b16 %v1183
      %v1432 = vunpack.c.h.b16 %v1183
      %v1433 = vunpack.c.l.b16 %v1184
      %v1434 = vunpack.c.l.b16 %v1185
      %v1435 = vunpack.c.h.b16 %v1185
      %v1436 = vunpack.c.l.b16 %v1186
      %v1437 = vunpack.c.l.b16 %v1187
      %v1438 = vunpack.c.h.b16 %v1187
      %v1439 = vunpack.c.l.b16 %v1188
      %v1440 = vunpack.c.l.b16 %v1189
      %v1441 = vunpack.c.h.b16 %v1189
      %v1442 = vunpack.c.l.b16 %v1190
      %v1443 = vunpack.c.l.b16 %v1191
      %v1444 = vunpack.c.h.b16 %v1191
      %v1445 = vunpack.c.l.b16 %v1192
      %v1446 = vunpack.c.l.b16 %v1193
      %v1447 = vunpack.c.h.b16 %v1193
      %v1448 = vunpack.c.l.b16 %v1194
      %v1449 = vunpack.c.l.b16 %v1195
      %v1450 = vunpack.c.h.b16 %v1195
      %v1451 = vunpack.c.l.b16 %v1196
      %v1452 = vunpack.c.l.b16 %v1197
      %v1453 = vunpack.c.h.b16 %v1197
      %v1454 = vunpack.c.l.b16 %v1198
      %v1455 = vunpack.c.l.b16 %v1199
      %v1456 = vunpack.c.h.b16 %v1199
      %v1457 = vunpack.c.l.b16 %v1200
      %v1458 = vpack.c.b16 %v1317, %v1314
      %v1459 = vpack.c.b16 %v1318, %v1315
      %v1460 = vpack.c.b16 %v1319, %v1316
      %v1461 = vpack.c.b16 %v1323, %v1320
      %v1462 = vpack.c.b16 %v1324, %v1321
      %v1463 = vpack.c.b16 %v1325, %v1322
      %v1464 = vpack.c.b16 %v1329, %v1326
      %v1465 = vpack.c.b16 %v1330, %v1327
      %v1466 = vpack.c.b16 %v1331, %v1328
      %v1467 = vpack.c.b16 %v1335, %v1332
      %v1468 = vpack.c.b16 %v1336, %v1333
      %v1469 = vpack.c.b16 %v1337, %v1334
      %v1470 = vpack.c.b16 %v1341, %v1338
      %v1471 = vpack.c.b16 %v1342, %v1339
      %v1472 = vpack.c.b16 %v1343, %v1340
      %v1473 = vpack.c.b16 %v1347, %v1344
      %v1474 = vpack.c.b16 %v1348, %v1345
      %v1475 = vpack.c.b16 %v1349, %v1346
      %v1476 = vpack.c.b16 %v1353, %v1350
      %v1477 = vpack.c.b16 %v1354, %v1351
      %v1478 = vpack.c.b16 %v1355, %v1352
      %v1479 = vpack.c.b16 %v1359, %v1356
      %v1480 = vpack.c.b16 %v1360, %v1357
      %v1481 = vpack.c.b16 %v1361, %v1358
      %v1482 = vpack.c.b16 %v1365, %v1362
      %v1483 = vpack.c.b16 %v1366, %v1363
      %v1484 = vpack.c.b16 %v1367, %v1364
      %v1485 = vpack.c.b16 %v1371, %v1368
      %v1486 = vpack.c.b16 %v1372, %v1369
      %v1487 = vpack.c.b16 %v1373, %v1370
      %v1488 = vpack.c.b16 %v1377, %v1374
      %v1489 = vpack.c.b16 %v1378, %v1375
      %v1490 = vpack.c.b16 %v1379, %v1376
      %v1491 = vpack.c.b16 %v1383, %v1380
      %v1492 = vpack.c.b16 %v1384, %v1381
      %v1493 = vpack.c.b16 %v1385, %v1382
      %v1494 = vpack.c.b16 %v1389, %v1386
      %v1495 = vpack.c.b16 %v1390, %v1387
      %v1496 = vpack.c.b16 %v1391, %v1388
      %v1497 = vpack.c.b16 %v1395, %v1392
      %v1498 = vpack.c.b16 %v1396, %v1393
      %v1499 = vpack.c.b16 %v1397, %v1394
      %v1500 = vpack.c.b16 %v1401, %v1398
      %v1501 = vpack.c.b16 %v1402, %v1399
      %v1502 = vpack.c.b16 %v1403, %v1400
      %v1503 = vpack.c.b16 %v1407, %v1404
      %v1504 = vpack.c.b16 %v1408, %v1405
      %v1505 = vpack.c.b16 %v1409, %v1406
      %v1506 = vpack.c.b16 %v1413, %v1410
      %v1507 = vpack.c.b16 %v1414, %v1411
      %v1508 = vpack.c.b16 %v1415, %v1412
      %v1509 = vpack.c.b16 %v1419, %v1416
      %v1510 = vpack.c.b16 %v1420, %v1417
      %v1511 = vpack.c.b16 %v1421, %v1418
      %v1512 = vpack.c.b16 %v1425, %v1422
      %v1513 = vpack.c.b16 %v1426, %v1423
      %v1514 = vpack.c.b16 %v1427, %v1424
      %v1515 = vpack.c.b16 %v1431, %v1428
      %v1516 = vpack.c.b16 %v1432, %v1429
      %v1517 = vpack.c.b16 %v1433, %v1430
      %v1518 = vpack.c.b16 %v1437, %v1434
      %v1519 = vpack.c.b16 %v1438, %v1435
      %v1520 = vpack.c.b16 %v1439, %v1436
      %v1521 = vpack.c.b16 %v1443, %v1440
      %v1522 = vpack.c.b16 %v1444, %v1441
      %v1523 = vpack.c.b16 %v1445, %v1442
      %v1524 = vpack.c.b16 %v1449, %v1446
      %v1525 = vpack.c.b16 %v1450, %v1447
      %v1526 = vpack.c.b16 %v1451, %v1448
      %v1527 = vpack.c.b16 %v1455, %v1452
      %v1528 = vpack.c.b16 %v1456, %v1453
      %v1529 = vpack.c.b16 %v1457, %v1454
      %1602 = vmatprep.subr.bf16.mxu0 %v1459
      %1603 = vmatpush1.bf16.msra.mxu0 %v1458
      %1604 = vmatprep.subr.bf16.mxu0 %v1462
      %1605 = vmatpush1.bf16.msra.mxu0 %v1461
      %1606 = vmatprep.subr.bf16.mxu0 %v1465
      %1607 = vmatpush1.bf16.msra.mxu0 %v1464
      %1608 = vmatprep.subr.bf16.mxu0 %v1468
      %1609 = vmatpush1.bf16.msra.mxu0 %v1467
      %1610 = vmatprep.subr.bf16.mxu0 %v1471
      %1611 = vmatpush1.bf16.msra.mxu0 %v1470
      %1612 = vmatprep.subr.bf16.mxu0 %v1474
      %1613 = vmatpush1.bf16.msra.mxu0 %v1473
      %1614 = vmatprep.subr.bf16.mxu0 %v1477
      %1615 = vmatpush1.bf16.msra.mxu0 %v1476
      %1616 = vmatprep.subr.bf16.mxu0 %v1480
      %1617 = vmatpush1.bf16.msra.mxu0 %v1479
      %1618 = vmatprep.subr.bf16.mxu0 %v1483
      %1619 = vmatpush1.bf16.msra.mxu0 %v1482
      %1620 = vmatprep.subr.bf16.mxu0 %v1486
      %1621 = vmatpush1.bf16.msra.mxu0 %v1485
      %1622 = vmatprep.subr.bf16.mxu0 %v1489
      %1623 = vmatpush1.bf16.msra.mxu0 %v1488
      %1624 = vmatprep.subr.bf16.mxu0 %v1492
      %1625 = vmatpush1.bf16.msra.mxu0 %v1491
      %1626 = vmatprep.subr.bf16.mxu0 %v1495
      %1627 = vmatpush1.bf16.msra.mxu0 %v1494
      %1628 = vmatprep.subr.bf16.mxu0 %v1498
      %1629 = vmatpush1.bf16.msra.mxu0 %v1497
      %1630 = vmatprep.subr.bf16.mxu0 %v1501
      %1631 = vmatpush1.bf16.msra.mxu0 %v1500
      %1632 = vmatprep.subr.bf16.mxu0 %v1504
      %1633 = vmatpush1.bf16.msra.mxu0 %v1503
      %1634 = vmatprep.mubr.bf16.mxu0 %v1100
      %1635 = vmatmul.mubr.bf16.gmra.mrb[0].mxu0 %v1099
      %v1636 = vpop.f32.mrb[0].mxu0
      %v1637 = vadd.f32 %v1206, %v1636
      %v1638 = vpop.f32.mrb[0].mxu0
      %v1639 = vadd.f32 %v1210, %v1638
      %v1640 = vpop.f32.mrb[0].mxu0
      %v1641 = vadd.f32 %v1206, %v1640
      %v1642 = vpop.f32.mrb[0].mxu0
      %v1643 = vadd.f32 %v1210, %v1642
      %1644 = vmatprep.mubr.bf16.mxu0 %v1103
      %1645 = vmatmul.mubr.bf16.gmra.mrb[0].mxu0 %v1102
      %v1646 = vpop.f32.mrb[0].mxu0
      %v1647 = vadd.f32 %v1206, %v1646
      %v1648 = vpop.f32.mrb[0].mxu0
      %v1649 = vadd.f32 %v1210, %v1648
      %v1650 = vpop.f32.mrb[0].mxu0
      %v1651 = vadd.f32 %v1206, %v1650
      %v1652 = vpop.f32.mrb[0].mxu0
      %v1653 = vadd.f32 %v1210, %v1652
      %1654 = vdwg.mxu0
      %1655 = vmatprep.subr.bf16.mxu0 %v1507
      %1656 = vmatpush1.bf16.msra.mxu0 %v1506
      %1657 = vmatprep.subr.bf16.mxu0 %v1510
      %1658 = vmatpush1.bf16.msra.mxu0 %v1509
      %1659 = vmatprep.subr.bf16.mxu0 %v1513
      %1660 = vmatpush1.bf16.msra.mxu0 %v1512
      %1661 = vmatprep.subr.bf16.mxu0 %v1516
      %1662 = vmatpush1.bf16.msra.mxu0 %v1515
      %1663 = vmatprep.subr.bf16.mxu0 %v1519
      %1664 = vmatpush1.bf16.msra.mxu0 %v1518
      %1665 = vmatprep.subr.bf16.mxu0 %v1522
      %1666 = vmatpush1.bf16.msra.mxu0 %v1521
      %1667 = vmatprep.subr.bf16.mxu0 %v1525
      %1668 = vmatpush1.bf16.msra.mxu0 %v1524
      %1669 = vmatprep.subr.bf16.mxu0 %v1528
      %1670 = vmatpush1.bf16.msra.mxu0 %v1527
      %1671 = vmatprep.subr.bf16.mxu0 0
      %1672 = vmatpush1.bf16.msra.mxu0 0
      %1673 = vmatprep.subr.bf16.mxu0 0
      %1674 = vmatpush1.bf16.msra.mxu0 0
      %1675 = vmatprep.subr.bf16.mxu0 0
      %1676 = vmatpush1.bf16.msra.mxu0 0
      %1677 = vmatprep.subr.bf16.mxu0 0
      %1678 = vmatpush1.bf16.msra.mxu0 0
      %1679 = vmatprep.subr.bf16.mxu0 0
      %1680 = vmatpush1.bf16.msra.mxu0 0
      %1681 = vmatprep.subr.bf16.mxu0 0
      %1682 = vmatpush1.bf16.msra.mxu0 0
      %1683 = vmatprep.subr.bf16.mxu0 0
      %1684 = vmatpush1.bf16.msra.mxu0 0
      %1685 = vmatprep.subr.bf16.mxu0 0
      %1686 = vmatpush1.bf16.msra.mxu0 0
      %1687 = vmatprep.mubr.bf16.mxu0 0
      %1688 = vmatmul.mubr.bf16.gmra.mrb[0].mxu0 %v1101
      %v1689 = vpop.f32.mrb[0].mxu0
      %v1690 = vadd.f32 %v1637, %v1689
      %v1691 = vpop.f32.mrb[0].mxu0
      %v1692 = vadd.f32 %v1639, %v1691
      %v1693 = vpop.f32.mrb[0].mxu0
      %v1694 = vadd.f32 %v1641, %v1693
      %v1695 = vpop.f32.mrb[0].mxu0
      %v1696 = vadd.f32 %v1643, %v1695
      %1697 = vmatprep.mubr.bf16.mxu0 0
      %1698 = vmatmul.mubr.bf16.gmra.mrb[0].mxu0 %v1104
      %v1699 = vpop.f32.mrb[0].mxu0
      %v1700 = vadd.f32 %v1647, %v1699
      %v1701 = vpop.f32.mrb[0].mxu0
      %v1702 = vadd.f32 %v1649, %v1701
      %v1703 = vpop.f32.mrb[0].mxu0
      %v1704 = vadd.f32 %v1651, %v1703
      %v1705 = vpop.f32.mrb[0].mxu0
      %v1706 = vadd.f32 %v1653, %v1705
      %1707 = vdwg.mxu0
      %1708 = vmatprep.subr.bf16.mxu0 0
      %1709 = vmatpush1.bf16.msra.mxu0 %v1460
      %1710 = vmatprep.subr.bf16.mxu0 0
      %1711 = vmatpush1.bf16.msra.mxu0 %v1463
      %1712 = vmatprep.subr.bf16.mxu0 0
      %1713 = vmatpush1.bf16.msra.mxu0 %v1466
      %1714 = vmatprep.subr.bf16.mxu0 0
      %1715 = vmatpush1.bf16.msra.mxu0 %v1469
      %1716 = vmatprep.subr.bf16.mxu0 0
      %1717 = vmatpush1.bf16.msra.mxu0 %v1472
      %1718 = vmatprep.subr.bf16.mxu0 0
      %1719 = vmatpush1.bf16.msra.mxu0 %v1475
      %1720 = vmatprep.subr.bf16.mxu0 0
      %1721 = vmatpush1.bf16.msra.mxu0 %v1478
      %1722 = vmatprep.subr.bf16.mxu0 0
      %1723 = vmatpush1.bf16.msra.mxu0 %v1481
      %1724 = vmatprep.subr.bf16.mxu0 0
      %1725 = vmatpush1.bf16.msra.mxu0 %v1484
      %1726 = vmatprep.subr.bf16.mxu0 0
      %1727 = vmatpush1.bf16.msra.mxu0 %v1487
      %1728 = vmatprep.subr.bf16.mxu0 0
      %1729 = vmatpush1.bf16.msra.mxu0 %v1490
      %1730 = vmatprep.subr.bf16.mxu0 0
      %1731 = vmatpush1.bf16.msra.mxu0 %v1493
      %1732 = vmatprep.subr.bf16.mxu0 0
      %1733 = vmatpush1.bf16.msra.mxu0 %v1496
      %1734 = vmatprep.subr.bf16.mxu0 0
      %1735 = vmatpush1.bf16.msra.mxu0 %v1499
      %1736 = vmatprep.subr.bf16.mxu0 0
      %1737 = vmatpush1.bf16.msra.mxu0 %v1502
      %1738 = vmatprep.subr.bf16.mxu0 0
      %1739 = vmatpush1.bf16.msra.mxu0 %v1505
      %1740 = vmatprep.mubr.bf16.mxu0 %v1100
      %1741 = vmatmul.mubr.bf16.gmra.mrb[0].mxu0 %v1099
      %v1742 = vpop.f32.mrb[0].mxu0
      %v1743 = vadd.f32 %v1214, %v1742
      %v1744 = vpop.f32.mrb[0].mxu0
      %v1745 = vpop.f32.mrb[0].mxu0
      %v1746 = vadd.f32 %v1214, %v1745
      %v1747 = vpop.f32.mrb[0].mxu0
      %1748 = vmatprep.mubr.bf16.mxu0 %v1103
      %1749 = vmatmul.mubr.bf16.gmra.mrb[0].mxu0 %v1102
      %v1750 = vpop.f32.mrb[0].mxu0
      %v1751 = vadd.f32 %v1214, %v1750
      %v1752 = vpop.f32.mrb[0].mxu0
      %v1753 = vpop.f32.mrb[0].mxu0
      %v1754 = vadd.f32 %v1214, %v1753
      %v1755 = vpop.f32.mrb[0].mxu0
      %1756 = vdwg.mxu0
      %1757 = vmatprep.subr.bf16.mxu0 0
      %1758 = vmatpush1.bf16.msra.mxu0 %v1508
      %1759 = vmatprep.subr.bf16.mxu0 0
      %1760 = vmatpush1.bf16.msra.mxu0 %v1511
      %1761 = vmatprep.subr.bf16.mxu0 0
      %1762 = vmatpush1.bf16.msra.mxu0 %v1514
      %1763 = vmatprep.subr.bf16.mxu0 0
      %1764 = vmatpush1.bf16.msra.mxu0 %v1517
      %1765 = vmatprep.subr.bf16.mxu0 0
      %1766 = vmatpush1.bf16.msra.mxu0 %v1520
      %1767 = vmatprep.subr.bf16.mxu0 0
      %1768 = vmatpush1.bf16.msra.mxu0 %v1523
      %1769 = vmatprep.subr.bf16.mxu0 0
      %1770 = vmatpush1.bf16.msra.mxu0 %v1526
      %1771 = vmatprep.subr.bf16.mxu0 0
      %1772 = vmatpush1.bf16.msra.mxu0 %v1529
      %1773 = vmatprep.subr.bf16.mxu0 0
      %1774 = vmatpush1.bf16.msra.mxu0 0
      %1775 = vmatprep.subr.bf16.mxu0 0
      %1776 = vmatpush1.bf16.msra.mxu0 0
      %1777 = vmatprep.subr.bf16.mxu0 0
      %1778 = vmatpush1.bf16.msra.mxu0 0
      %1779 = vmatprep.subr.bf16.mxu0 0
      %1780 = vmatpush1.bf16.msra.mxu0 0
      %1781 = vmatprep.subr.bf16.mxu0 0
      %1782 = vmatpush1.bf16.msra.mxu0 0
      %1783 = vmatprep.subr.bf16.mxu0 0
      %1784 = vmatpush1.bf16.msra.mxu0 0
      %1785 = vmatprep.subr.bf16.mxu0 0
      %1786 = vmatpush1.bf16.msra.mxu0 0
      %1787 = vmatprep.subr.bf16.mxu0 0
      %1788 = vmatpush1.bf16.msra.mxu0 0
      %1789 = vmatprep.mubr.bf16.mxu0 0
      %1790 = vmatmul.mubr.bf16.gmra.mrb[0].mxu0 %v1101
      %v1791 = vpop.f32.mrb[0].mxu0
      %v1792 = vadd.f32 %v1743, %v1791
      %v1793 = vpop.f32.mrb[0].mxu0
      %v1794 = vpop.f32.mrb[0].mxu0
      %v1795 = vadd.f32 %v1746, %v1794
      %v1796 = vpop.f32.mrb[0].mxu0
      %1797 = vmatprep.mubr.bf16.mxu0 0
      %1798 = vmatmul.mubr.bf16.gmra.mrb[0].mxu0 %v1104
      %v1799 = vpop.f32.mrb[0].mxu0
      %v1800 = vadd.f32 %v1751, %v1799
      %v1801 = vpop.f32.mrb[0].mxu0
      %v1802 = vpop.f32.mrb[0].mxu0
      %v1803 = vadd.f32 %v1754, %v1802
      %v1804 = vpop.f32.mrb[0].mxu0
      %1805 = vdwg.mxu0
      %v1806 = vmax.f32 %v1690, 0.0
      %v1807 = vmax.f32 %v1692, 0.0
      %v1808 = vmax.f32 %v1792, 0.0
      %v1809 = vmax.f32 %v1694, 0.0
      %v1810 = vmax.f32 %v1696, 0.0
      %v1811 = vmax.f32 %v1795, 0.0
      %v1812 = vmax.f32 %v1700, 0.0
      %v1813 = vmax.f32 %v1702, 0.0
      %v1814 = vmax.f32 %v1800, 0.0
      %v1815 = vmax.f32 %v1704, 0.0
      %v1816 = vmax.f32 %v1706, 0.0
      %v1817 = vmax.f32 %v1803, 0.0
      %v1818 = vpack.c.bf16 %v1809, %v1806
      %v1819 = vpack.c.bf16 %v1810, %v1807
      %v1820 = vpack.c.bf16 %v1811, %v1808
      %v1821 = vpack.c.bf16 %v1815, %v1812
      %v1822 = vpack.c.bf16 %v1816, %v1813
      %v1823 = vpack.c.bf16 %v1817, %v1814
      %v1824 = vld [vmem:[%s1 + $0x540] sm:$0xff]
      %v1825 = vld [vmem:[%s1 + $0x54c] sm:$0xff]
      %v1826 = vld [vmem:[%s1 + $0x558] sm:$0xff]
      %v1827 = vld [vmem:[%s1 + $0x564] sm:$0xff]
      %v1828 = vld [vmem:[%s1 + $0x570] sm:$0xff]
      %v1829 = vld [vmem:[%s1 + $0x57c] sm:$0xff]
      %v1830 = vld [vmem:[%s1 + $0x588] sm:$0xff]
      %v1831 = vld [vmem:[%s1 + $0x594] sm:$0xff]
      %v1832 = vld [vmem:[%s1 + $0x5a0] sm:$0xff]
      %v1833 = vld [vmem:[%s1 + $0x5ac] sm:$0xff]
      %v1834 = vld [vmem:[%s1 + $0x5b8] sm:$0xff]
      %v1835 = vld [vmem:[%s1 + $0x5c4] sm:$0xff]
      %v1836 = vld [vmem:[%s1 + $0x5d0] sm:$0xff]
      %v1837 = vld [vmem:[%s1 + $0x5dc] sm:$0xff]
      %v1838 = vld [vmem:[%s1 + $0x5e8] sm:$0xff]
      %v1839 = vld [vmem:[%s1 + $0x5f4] sm:$0xff]
      %v1840 = vld [vmem:[%s1 + $0x600] sm:$0xff]
      %v1841 = vld [vmem:[%s1 + $0x60c] sm:$0xff]
      %v1842 = vld [vmem:[%s1 + $0x618] sm:$0xff]
      %v1843 = vld [vmem:[%s1 + $0x624] sm:$0xff]
      %v1844 = vld [vmem:[%s1 + $0x630] sm:$0xff]
      %v1845 = vld [vmem:[%s1 + $0x63c] sm:$0xff]
      %v1846 = vld [vmem:[%s1 + $0x648] sm:$0xff]
      %v1847 = vld [vmem:[%s1 + $0x654] sm:$0xff]
      %v1848 = vld [vmem:[%s1 + $0x660] sm:$0xff]
      %v1849 = vld [vmem:[%s1 + $0x66c] sm:$0xff]
      %v1850 = vld [vmem:[%s1 + $0x678] sm:$0xff]
      %v1851 = vld [vmem:[%s1 + $0x684] sm:$0xff]
      %v1852 = vld [vmem:[%s1 + $0x690] sm:$0xff]
      %v1853 = vld [vmem:[%s1 + $0x69c] sm:$0xff]
      %v1854 = vld [vmem:[%s1 + $0x6a8] sm:$0xff]
      %v1855 = vld [vmem:[%s1 + $0x6b4] sm:$0xff]
      %v1856 = vld [vmem:[%s1 + $0x6c0] sm:$0xff]
      %v1857 = vld [vmem:[%s1 + $0x6cc] sm:$0xff]
      %v1858 = vld [vmem:[%s1 + $0x6d8] sm:$0xff]
      %v1859 = vld [vmem:[%s1 + $0x6e4] sm:$0xff]
      %v1860 = vld [vmem:[%s1 + $0x6f0] sm:$0xff]
      %v1861 = vld [vmem:[%s1 + $0x6fc] sm:$0xff]
      %v1862 = vld [vmem:[%s1 + $0x708] sm:$0xff]
      %v1863 = vld [vmem:[%s1 + $0x714] sm:$0xff]
      %v1864 = vld [vmem:[%s1 + $0x720] sm:$0xff]
      %v1865 = vld [vmem:[%s1 + $0x72c] sm:$0xff]
      %v1866 = vld [vmem:[%s1 + $0x738] sm:$0xff]
      %v1867 = vld [vmem:[%s1 + $0x744] sm:$0xff]
      %v1868 = vld [vmem:[%s1 + $0x750] sm:$0xff]
      %v1869 = vld [vmem:[%s1 + $0x75c] sm:$0xff]
      %v1870 = vld [vmem:[%s1 + $0x768] sm:$0xff]
      %v1871 = vld [vmem:[%s1 + $0x774] sm:$0xff]
      %v1872 = vld [vmem:[%s2 + $0x6] sm:$0x3]
      %v1874 = vlaneseq
      %v1875 = vshrl.u32 %v1874, 7
      %v1876 = vsub.s32 0, %v1875
      %v1877 = vrot.slane %v1872, %v1876
      %v1878 = vlaneseq
      %v1879 = vshrl.u32 %v1878, 7
      %v1880 = vsub.s32 1, %v1879
      %v1881 = vrot.slane %v1872, %v1880
      %v1932 = vunpack.c.l.b16 %v1824
      %v1933 = vunpack.c.h.b16 %v1824
      %v1934 = vunpack.c.l.b16 %v1825
      %v1935 = vunpack.c.h.b16 %v1825
      %v1936 = vunpack.c.l.b16 %v1826
      %v1937 = vunpack.c.h.b16 %v1826
      %v1938 = vunpack.c.l.b16 %v1827
      %v1939 = vunpack.c.h.b16 %v1827
      %v1940 = vunpack.c.l.b16 %v1828
      %v1941 = vunpack.c.h.b16 %v1828
      %v1942 = vunpack.c.l.b16 %v1829
      %v1943 = vunpack.c.h.b16 %v1829
      %v1944 = vunpack.c.l.b16 %v1830
      %v1945 = vunpack.c.h.b16 %v1830
      %v1946 = vunpack.c.l.b16 %v1831
      %v1947 = vunpack.c.h.b16 %v1831
      %v1948 = vunpack.c.l.b16 %v1832
      %v1949 = vunpack.c.h.b16 %v1832
      %v1950 = vunpack.c.l.b16 %v1833
      %v1951 = vunpack.c.h.b16 %v1833
      %v1952 = vunpack.c.l.b16 %v1834
      %v1953 = vunpack.c.h.b16 %v1834
      %v1954 = vunpack.c.l.b16 %v1835
      %v1955 = vunpack.c.h.b16 %v1835
      %v1956 = vunpack.c.l.b16 %v1836
      %v1957 = vunpack.c.h.b16 %v1836
      %v1958 = vunpack.c.l.b16 %v1837
      %v1959 = vunpack.c.h.b16 %v1837
      %v1960 = vunpack.c.l.b16 %v1838
      %v1961 = vunpack.c.h.b16 %v1838
      %v1962 = vunpack.c.l.b16 %v1839
      %v1963 = vunpack.c.h.b16 %v1839
      %v1964 = vunpack.c.l.b16 %v1840
      %v1965 = vunpack.c.h.b16 %v1840
      %v1966 = vunpack.c.l.b16 %v1841
      %v1967 = vunpack.c.h.b16 %v1841
      %v1968 = vunpack.c.l.b16 %v1842
      %v1969 = vunpack.c.h.b16 %v1842
      %v1970 = vunpack.c.l.b16 %v1843
      %v1971 = vunpack.c.h.b16 %v1843
      %v1972 = vunpack.c.l.b16 %v1844
      %v1973 = vunpack.c.h.b16 %v1844
      %v1974 = vunpack.c.l.b16 %v1845
      %v1975 = vunpack.c.h.b16 %v1845
      %v1976 = vunpack.c.l.b16 %v1846
      %v1977 = vunpack.c.h.b16 %v1846
      %v1978 = vunpack.c.l.b16 %v1847
      %v1979 = vunpack.c.h.b16 %v1847
      %v1980 = vunpack.c.l.b16 %v1848
      %v1981 = vunpack.c.h.b16 %v1848
      %v1982 = vunpack.c.l.b16 %v1849
      %v1983 = vunpack.c.h.b16 %v1849
      %v1984 = vunpack.c.l.b16 %v1850
      %v1985 = vunpack.c.h.b16 %v1850
      %v1986 = vunpack.c.l.b16 %v1851
      %v1987 = vunpack.c.h.b16 %v1851
      %v1988 = vunpack.c.l.b16 %v1852
      %v1989 = vunpack.c.h.b16 %v1852
      %v1990 = vunpack.c.l.b16 %v1853
      %v1991 = vunpack.c.h.b16 %v1853
      %v1992 = vunpack.c.l.b16 %v1854
      %v1993 = vunpack.c.h.b16 %v1854
      %v1994 = vunpack.c.l.b16 %v1855
      %v1995 = vunpack.c.h.b16 %v1855
      %v1996 = vunpack.c.l.b16 %v1856
      %v1997 = vunpack.c.h.b16 %v1856
      %v1998 = vunpack.c.l.b16 %v1857
      %v1999 = vunpack.c.h.b16 %v1857
      %v2000 = vunpack.c.l.b16 %v1858
      %v2001 = vunpack.c.h.b16 %v1858
      %v2002 = vunpack.c.l.b16 %v1859
      %v2003 = vunpack.c.h.b16 %v1859
      %v2004 = vunpack.c.l.b16 %v1860
      %v2005 = vunpack.c.h.b16 %v1860
      %v2006 = vunpack.c.l.b16 %v1861
      %v2007 = vunpack.c.h.b16 %v1861
      %v2008 = vunpack.c.l.b16 %v1862
      %v2009 = vunpack.c.h.b16 %v1862
      %v2010 = vunpack.c.l.b16 %v1863
      %v2011 = vunpack.c.h.b16 %v1863
      %v2012 = vunpack.c.l.b16 %v1864
      %v2013 = vunpack.c.h.b16 %v1864
      %v2014 = vunpack.c.l.b16 %v1865
      %v2015 = vunpack.c.h.b16 %v1865
      %v2016 = vunpack.c.l.b16 %v1866
      %v2017 = vunpack.c.h.b16 %v1866
      %v2018 = vunpack.c.l.b16 %v1867
      %v2019 = vunpack.c.h.b16 %v1867
      %v2020 = vunpack.c.l.b16 %v1868
      %v2021 = vunpack.c.h.b16 %v1868
      %v2022 = vunpack.c.l.b16 %v1869
      %v2023 = vunpack.c.h.b16 %v1869
      %v2024 = vunpack.c.l.b16 %v1870
      %v2025 = vunpack.c.h.b16 %v1870
      %v2026 = vunpack.c.l.b16 %v1871
      %v2027 = vunpack.c.h.b16 %v1871
      %v2028 = vpack.c.b16 %v1934, %v1932
      %v2029 = vpack.c.b16 %v1935, %v1933
      %v2030 = vpack.c.b16 %v1938, %v1936
      %v2031 = vpack.c.b16 %v1939, %v1937
      %v2032 = vpack.c.b16 %v1942, %v1940
      %v2033 = vpack.c.b16 %v1943, %v1941
      %v2034 = vpack.c.b16 %v1946, %v1944
      %v2035 = vpack.c.b16 %v1947, %v1945
      %v2036 = vpack.c.b16 %v1950, %v1948
      %v2037 = vpack.c.b16 %v1951, %v1949
      %v2038 = vpack.c.b16 %v1954, %v1952
      %v2039 = vpack.c.b16 %v1955, %v1953
      %v2040 = vpack.c.b16 %v1958, %v1956
      %v2041 = vpack.c.b16 %v1959, %v1957
      %v2042 = vpack.c.b16 %v1962, %v1960
      %v2043 = vpack.c.b16 %v1963, %v1961
      %v2044 = vpack.c.b16 %v1966, %v1964
      %v2045 = vpack.c.b16 %v1967, %v1965
      %v2046 = vpack.c.b16 %v1970, %v1968
      %v2047 = vpack.c.b16 %v1971, %v1969
      %v2048 = vpack.c.b16 %v1974, %v1972
      %v2049 = vpack.c.b16 %v1975, %v1973
      %v2050 = vpack.c.b16 %v1978, %v1976
      %v2051 = vpack.c.b16 %v1979, %v1977
      %v2052 = vpack.c.b16 %v1982, %v1980
      %v2053 = vpack.c.b16 %v1983, %v1981
      %v2054 = vpack.c.b16 %v1986, %v1984
      %v2055 = vpack.c.b16 %v1987, %v1985
      %v2056 = vpack.c.b16 %v1990, %v1988
      %v2057 = vpack.c.b16 %v1991, %v1989
      %v2058 = vpack.c.b16 %v1994, %v1992
      %v2059 = vpack.c.b16 %v1995, %v1993
      %v2060 = vpack.c.b16 %v1998, %v1996
      %v2061 = vpack.c.b16 %v1999, %v1997
      %v2062 = vpack.c.b16 %v2002, %v2000
      %v2063 = vpack.c.b16 %v2003, %v2001
      %v2064 = vpack.c.b16 %v2006, %v2004
      %v2065 = vpack.c.b16 %v2007, %v2005
      %v2066 = vpack.c.b16 %v2010, %v2008
      %v2067 = vpack.c.b16 %v2011, %v2009
      %v2068 = vpack.c.b16 %v2014, %v2012
      %v2069 = vpack.c.b16 %v2015, %v2013
      %v2070 = vpack.c.b16 %v2018, %v2016
      %v2071 = vpack.c.b16 %v2019, %v2017
      %v2072 = vpack.c.b16 %v2022, %v2020
      %v2073 = vpack.c.b16 %v2023, %v2021
      %v2074 = vpack.c.b16 %v2026, %v2024
      %v2075 = vpack.c.b16 %v2027, %v2025
      %2124 = vmatprep.subr.bf16.mxu0 %v2029
      %2125 = vmatpush1.bf16.msra.mxu0 %v2028
      %2126 = vmatprep.subr.bf16.mxu0 %v2031
      %2127 = vmatpush1.bf16.msra.mxu0 %v2030
      %2128 = vmatprep.subr.bf16.mxu0 %v2033
      %2129 = vmatpush1.bf16.msra.mxu0 %v2032
      %2130 = vmatprep.subr.bf16.mxu0 %v2035
      %2131 = vmatpush1.bf16.msra.mxu0 %v2034
      %2132 = vmatprep.subr.bf16.mxu0 %v2037
      %2133 = vmatpush1.bf16.msra.mxu0 %v2036
      %2134 = vmatprep.subr.bf16.mxu0 %v2039
      %2135 = vmatpush1.bf16.msra.mxu0 %v2038
      %2136 = vmatprep.subr.bf16.mxu0 %v2041
      %2137 = vmatpush1.bf16.msra.mxu0 %v2040
      %2138 = vmatprep.subr.bf16.mxu0 %v2043
      %2139 = vmatpush1.bf16.msra.mxu0 %v2042
      %2140 = vmatprep.subr.bf16.mxu0 %v2045
      %2141 = vmatpush1.bf16.msra.mxu0 %v2044
      %2142 = vmatprep.subr.bf16.mxu0 %v2047
      %2143 = vmatpush1.bf16.msra.mxu0 %v2046
      %2144 = vmatprep.subr.bf16.mxu0 %v2049
      %2145 = vmatpush1.bf16.msra.mxu0 %v2048
      %2146 = vmatprep.subr.bf16.mxu0 %v2051
      %2147 = vmatpush1.bf16.msra.mxu0 %v2050
      %2148 = vmatprep.subr.bf16.mxu0 %v2053
      %2149 = vmatpush1.bf16.msra.mxu0 %v2052
      %2150 = vmatprep.subr.bf16.mxu0 %v2055
      %2151 = vmatpush1.bf16.msra.mxu0 %v2054
      %2152 = vmatprep.subr.bf16.mxu0 %v2057
      %2153 = vmatpush1.bf16.msra.mxu0 %v2056
      %2154 = vmatprep.subr.bf16.mxu0 %v2059
      %2155 = vmatpush1.bf16.msra.mxu0 %v2058
      %2156 = vmatprep.mubr.bf16.mxu0 %v1819
      %2157 = vmatmul.mubr.bf16.gmra.mrb[0].mxu0 %v1818
      %v2158 = vpop.f32.mrb[0].mxu0
      %v2159 = vadd.f32 %v1877, %v2158
      %v2160 = vpop.f32.mrb[0].mxu0
      %v2161 = vadd.f32 %v1881, %v2160
      %v2162 = vpop.f32.mrb[0].mxu0
      %v2163 = vadd.f32 %v1877, %v2162
      %v2164 = vpop.f32.mrb[0].mxu0
      %v2165 = vadd.f32 %v1881, %v2164
      %2166 = vmatprep.mubr.bf16.mxu0 %v1822
      %2167 = vmatmul.mubr.bf16.gmra.mrb[0].mxu0 %v1821
      %v2168 = vpop.f32.mrb[0].mxu0
      %v2169 = vadd.f32 %v1877, %v2168
      %v2170 = vpop.f32.mrb[0].mxu0
      %v2171 = vadd.f32 %v1881, %v2170
      %v2172 = vpop.f32.mrb[0].mxu0
      %v2173 = vadd.f32 %v1877, %v2172
      %v2174 = vpop.f32.mrb[0].mxu0
      %v2175 = vadd.f32 %v1881, %v2174
      %2176 = vdwg.mxu0
      %2177 = vmatprep.subr.bf16.mxu0 %v2061
      %2178 = vmatpush1.bf16.msra.mxu0 %v2060
      %2179 = vmatprep.subr.bf16.mxu0 %v2063
      %2180 = vmatpush1.bf16.msra.mxu0 %v2062
      %2181 = vmatprep.subr.bf16.mxu0 %v2065
      %2182 = vmatpush1.bf16.msra.mxu0 %v2064
      %2183 = vmatprep.subr.bf16.mxu0 %v2067
      %2184 = vmatpush1.bf16.msra.mxu0 %v2066
      %2185 = vmatprep.subr.bf16.mxu0 %v2069
      %2186 = vmatpush1.bf16.msra.mxu0 %v2068
      %2187 = vmatprep.subr.bf16.mxu0 %v2071
      %2188 = vmatpush1.bf16.msra.mxu0 %v2070
      %2189 = vmatprep.subr.bf16.mxu0 %v2073
      %2190 = vmatpush1.bf16.msra.mxu0 %v2072
      %2191 = vmatprep.subr.bf16.mxu0 %v2075
      %2192 = vmatpush1.bf16.msra.mxu0 %v2074
      %2193 = vmatprep.subr.bf16.mxu0 0
      %2194 = vmatpush1.bf16.msra.mxu0 0
      %2195 = vmatprep.subr.bf16.mxu0 0
      %2196 = vmatpush1.bf16.msra.mxu0 0
      %2197 = vmatprep.subr.bf16.mxu0 0
      %2198 = vmatpush1.bf16.msra.mxu0 0
      %2199 = vmatprep.subr.bf16.mxu0 0
      %2200 = vmatpush1.bf16.msra.mxu0 0
      %2201 = vmatprep.subr.bf16.mxu0 0
      %2202 = vmatpush1.bf16.msra.mxu0 0
      %2203 = vmatprep.subr.bf16.mxu0 0
      %2204 = vmatpush1.bf16.msra.mxu0 0
      %2205 = vmatprep.subr.bf16.mxu0 0
      %2206 = vmatpush1.bf16.msra.mxu0 0
      %2207 = vmatprep.subr.bf16.mxu0 0
      %2208 = vmatpush1.bf16.msra.mxu0 0
      %2209 = vmatprep.mubr.bf16.mxu0 0
      %2210 = vmatmul.mubr.bf16.gmra.mrb[0].mxu0 %v1820
      %v2211 = vpop.f32.mrb[0].mxu0
      %v2212 = vadd.f32 %v2159, %v2211
      %v2213 = vpop.f32.mrb[0].mxu0
      %v2214 = vadd.f32 %v2161, %v2213
      %v2215 = vpop.f32.mrb[0].mxu0
      %v2216 = vadd.f32 %v2163, %v2215
      %v2217 = vpop.f32.mrb[0].mxu0
      %v2218 = vadd.f32 %v2165, %v2217
      %2219 = vmatprep.mubr.bf16.mxu0 0
      %2220 = vmatmul.mubr.bf16.gmra.mrb[0].mxu0 %v1823
      %v2221 = vpop.f32.mrb[0].mxu0
      %v2222 = vadd.f32 %v2169, %v2221
      %v2223 = vpop.f32.mrb[0].mxu0
      %v2224 = vadd.f32 %v2171, %v2223
      %v2225 = vpop.f32.mrb[0].mxu0
      %v2226 = vadd.f32 %v2173, %v2225
      %v2227 = vpop.f32.mrb[0].mxu0
      %v2228 = vadd.f32 %v2175, %v2227
      %2229 = vdwg.mxu0
      %v2230 = vmax.f32 %v2212, 0.0
      %v2231 = vmax.f32 %v2214, 0.0
      %v2232 = vmax.f32 %v2216, 0.0
      %v2233 = vmax.f32 %v2218, 0.0
      %v2234 = vmax.f32 %v2222, 0.0
      %v2235 = vmax.f32 %v2224, 0.0
      %v2236 = vmax.f32 %v2226, 0.0
      %v2237 = vmax.f32 %v2228, 0.0
      %v2238 = vpack.c.bf16 %v2232, %v2230
      %v2239 = vpack.c.bf16 %v2233, %v2231
      %v2240 = vpack.c.bf16 %v2236, %v2234
      %v2241 = vpack.c.bf16 %v2237, %v2235
      %v2242 = vld [vmem:[%s1 + $0x780] sm:$0xff]
      %v2243 = vld [vmem:[%s1 + $0x78c] sm:$0xff]
      %v2244 = vld [vmem:[%s1 + $0x798] sm:$0xff]
      %v2245 = vld [vmem:[%s1 + $0x7a4] sm:$0xff]
      %v2246 = vld [vmem:[%s1 + $0x7b0] sm:$0xff]
      %v2247 = vld [vmem:[%s1 + $0x7bc] sm:$0xff]
      %v2248 = vld [vmem:[%s1 + $0x7c8] sm:$0xff]
      %v2249 = vld [vmem:[%s1 + $0x7d4] sm:$0xff]
      %v2250 = vld [vmem:[%s1 + $0x7e0] sm:$0xff]
      %v2251 = vld [vmem:[%s1 + $0x7ec] sm:$0xff]
      %v2252 = vld [vmem:[%s1 + $0x7f8] sm:$0xff]
      %v2253 = vld [vmem:[%s1 + $0x804] sm:$0xff]
      %v2254 = vld [vmem:[%s1 + $0x810] sm:$0xff]
      %v2255 = vld [vmem:[%s1 + $0x81c] sm:$0xff]
      %v2256 = vld [vmem:[%s1 + $0x828] sm:$0xff]
      %v2257 = vld [vmem:[%s1 + $0x834] sm:$0xff]
      %v2258 = vld [vmem:[%s1 + $0x840] sm:$0xff]
      %v2259 = vld [vmem:[%s1 + $0x84c] sm:$0xff]
      %v2260 = vld [vmem:[%s1 + $0x858] sm:$0xff]
      %v2261 = vld [vmem:[%s1 + $0x864] sm:$0xff]
      %v2262 = vld [vmem:[%s1 + $0x870] sm:$0xff]
      %v2263 = vld [vmem:[%s1 + $0x87c] sm:$0xff]
      %v2264 = vld [vmem:[%s1 + $0x888] sm:$0xff]
      %v2265 = vld [vmem:[%s1 + $0x894] sm:$0xff]
      %v2266 = vld [vmem:[%s1 + $0x8a0] sm:$0xff]
      %v2267 = vld [vmem:[%s1 + $0x8ac] sm:$0xff]
      %v2268 = vld [vmem:[%s1 + $0x8b8] sm:$0xff]
      %v2269 = vld [vmem:[%s1 + $0x8c4] sm:$0xff]
      %v2270 = vld [vmem:[%s1 + $0x8d0] sm:$0xff]
      %v2271 = vld [vmem:[%s1 + $0x8dc] sm:$0xff]
      %v2272 = vld [vmem:[%s1 + $0x8e8] sm:$0xff]
      %v2273 = vld [vmem:[%s1 + $0x8f4] sm:$0xff]
      %v2274 = vld [vmem:[%s2 + $0x8] sm:$0x3]
      %v2276 = vlaneseq
      %v2277 = vshrl.u32 %v2276, 7
      %v2278 = vsub.s32 0, %v2277
      %v2279 = vrot.slane %v2274, %v2278
      %v2280 = vlaneseq
      %v2281 = vshrl.u32 %v2280, 7
      %v2282 = vsub.s32 1, %v2281
      %v2283 = vrot.slane %v2274, %v2282
      %v2318 = vunpack.c.l.b16 %v2242
      %v2319 = vunpack.c.h.b16 %v2242
      %v2320 = vunpack.c.l.b16 %v2243
      %v2321 = vunpack.c.h.b16 %v2243
      %v2322 = vunpack.c.l.b16 %v2244
      %v2323 = vunpack.c.h.b16 %v2244
      %v2324 = vunpack.c.l.b16 %v2245
      %v2325 = vunpack.c.h.b16 %v2245
      %v2326 = vunpack.c.l.b16 %v2246
      %v2327 = vunpack.c.h.b16 %v2246
      %v2328 = vunpack.c.l.b16 %v2247
      %v2329 = vunpack.c.h.b16 %v2247
      %v2330 = vunpack.c.l.b16 %v2248
      %v2331 = vunpack.c.h.b16 %v2248
      %v2332 = vunpack.c.l.b16 %v2249
      %v2333 = vunpack.c.h.b16 %v2249
      %v2334 = vunpack.c.l.b16 %v2250
      %v2335 = vunpack.c.h.b16 %v2250
      %v2336 = vunpack.c.l.b16 %v2251
      %v2337 = vunpack.c.h.b16 %v2251
      %v2338 = vunpack.c.l.b16 %v2252
      %v2339 = vunpack.c.h.b16 %v2252
      %v2340 = vunpack.c.l.b16 %v2253
      %v2341 = vunpack.c.h.b16 %v2253
      %v2342 = vunpack.c.l.b16 %v2254
      %v2343 = vunpack.c.h.b16 %v2254
      %v2344 = vunpack.c.l.b16 %v2255
      %v2345 = vunpack.c.h.b16 %v2255
      %v2346 = vunpack.c.l.b16 %v2256
      %v2347 = vunpack.c.h.b16 %v2256
      %v2348 = vunpack.c.l.b16 %v2257
      %v2349 = vunpack.c.h.b16 %v2257
      %v2350 = vunpack.c.l.b16 %v2258
      %v2351 = vunpack.c.h.b16 %v2258
      %v2352 = vunpack.c.l.b16 %v2259
      %v2353 = vunpack.c.h.b16 %v2259
      %v2354 = vunpack.c.l.b16 %v2260
      %v2355 = vunpack.c.h.b16 %v2260
      %v2356 = vunpack.c.l.b16 %v2261
      %v2357 = vunpack.c.h.b16 %v2261
      %v2358 = vunpack.c.l.b16 %v2262
      %v2359 = vunpack.c.h.b16 %v2262
      %v2360 = vunpack.c.l.b16 %v2263
      %v2361 = vunpack.c.h.b16 %v2263
      %v2362 = vunpack.c.l.b16 %v2264
      %v2363 = vunpack.c.h.b16 %v2264
      %v2364 = vunpack.c.l.b16 %v2265
      %v2365 = vunpack.c.h.b16 %v2265
      %v2366 = vunpack.c.l.b16 %v2266
      %v2367 = vunpack.c.h.b16 %v2266
      %v2368 = vunpack.c.l.b16 %v2267
      %v2369 = vunpack.c.h.b16 %v2267
      %v2370 = vunpack.c.l.b16 %v2268
      %v2371 = vunpack.c.h.b16 %v2268
      %v2372 = vunpack.c.l.b16 %v2269
      %v2373 = vunpack.c.h.b16 %v2269
      %v2374 = vunpack.c.l.b16 %v2270
      %v2375 = vunpack.c.h.b16 %v2270
      %v2376 = vunpack.c.l.b16 %v2271
      %v2377 = vunpack.c.h.b16 %v2271
      %v2378 = vunpack.c.l.b16 %v2272
      %v2379 = vunpack.c.h.b16 %v2272
      %v2380 = vunpack.c.l.b16 %v2273
      %v2381 = vunpack.c.h.b16 %v2273
      %v2382 = vpack.c.b16 %v2320, %v2318
      %v2383 = vpack.c.b16 %v2321, %v2319
      %v2384 = vpack.c.b16 %v2324, %v2322
      %v2385 = vpack.c.b16 %v2325, %v2323
      %v2386 = vpack.c.b16 %v2328, %v2326
      %v2387 = vpack.c.b16 %v2329, %v2327
      %v2388 = vpack.c.b16 %v2332, %v2330
      %v2389 = vpack.c.b16 %v2333, %v2331
      %v2390 = vpack.c.b16 %v2336, %v2334
      %v2391 = vpack.c.b16 %v2337, %v2335
      %v2392 = vpack.c.b16 %v2340, %v2338
      %v2393 = vpack.c.b16 %v2341, %v2339
      %v2394 = vpack.c.b16 %v2344, %v2342
      %v2395 = vpack.c.b16 %v2345, %v2343
      %v2396 = vpack.c.b16 %v2348, %v2346
      %v2397 = vpack.c.b16 %v2349, %v2347
      %v2398 = vpack.c.b16 %v2352, %v2350
      %v2399 = vpack.c.b16 %v2353, %v2351
      %v2400 = vpack.c.b16 %v2356, %v2354
      %v2401 = vpack.c.b16 %v2357, %v2355
      %v2402 = vpack.c.b16 %v2360, %v2358
      %v2403 = vpack.c.b16 %v2361, %v2359
      %v2404 = vpack.c.b16 %v2364, %v2362
      %v2405 = vpack.c.b16 %v2365, %v2363
      %v2406 = vpack.c.b16 %v2368, %v2366
      %v2407 = vpack.c.b16 %v2369, %v2367
      %v2408 = vpack.c.b16 %v2372, %v2370
      %v2409 = vpack.c.b16 %v2373, %v2371
      %v2410 = vpack.c.b16 %v2376, %v2374
      %v2411 = vpack.c.b16 %v2377, %v2375
      %v2412 = vpack.c.b16 %v2380, %v2378
      %v2413 = vpack.c.b16 %v2381, %v2379
      %2446 = vmatprep.subr.bf16.mxu0 %v2383
      %2447 = vmatpush1.bf16.msra.mxu0 %v2382
      %2448 = vmatprep.subr.bf16.mxu0 %v2385
      %2449 = vmatpush1.bf16.msra.mxu0 %v2384
      %2450 = vmatprep.subr.bf16.mxu0 %v2387
      %2451 = vmatpush1.bf16.msra.mxu0 %v2386
      %2452 = vmatprep.subr.bf16.mxu0 %v2389
      %2453 = vmatpush1.bf16.msra.mxu0 %v2388
      %2454 = vmatprep.subr.bf16.mxu0 %v2391
      %2455 = vmatpush1.bf16.msra.mxu0 %v2390
      %2456 = vmatprep.subr.bf16.mxu0 %v2393
      %2457 = vmatpush1.bf16.msra.mxu0 %v2392
      %2458 = vmatprep.subr.bf16.mxu0 %v2395
      %2459 = vmatpush1.bf16.msra.mxu0 %v2394
      %2460 = vmatprep.subr.bf16.mxu0 %v2397
      %2461 = vmatpush1.bf16.msra.mxu0 %v2396
      %2462 = vmatprep.subr.bf16.mxu0 %v2399
      %2463 = vmatpush1.bf16.msra.mxu0 %v2398
      %2464 = vmatprep.subr.bf16.mxu0 %v2401
      %2465 = vmatpush1.bf16.msra.mxu0 %v2400
      %2466 = vmatprep.subr.bf16.mxu0 %v2403
      %2467 = vmatpush1.bf16.msra.mxu0 %v2402
      %2468 = vmatprep.subr.bf16.mxu0 %v2405
      %2469 = vmatpush1.bf16.msra.mxu0 %v2404
      %2470 = vmatprep.subr.bf16.mxu0 %v2407
      %2471 = vmatpush1.bf16.msra.mxu0 %v2406
      %2472 = vmatprep.subr.bf16.mxu0 %v2409
      %2473 = vmatpush1.bf16.msra.mxu0 %v2408
      %2474 = vmatprep.subr.bf16.mxu0 %v2411
      %2475 = vmatpush1.bf16.msra.mxu0 %v2410
      %2476 = vmatprep.subr.bf16.mxu0 %v2413
      %2477 = vmatpush1.bf16.msra.mxu0 %v2412
      %2478 = vmatprep.mubr.bf16.mxu0 %v2239
      %2479 = vmatmul.mubr.bf16.gmra.mrb[0].mxu0 %v2238
      %v2480 = vpop.f32.mrb[0].mxu0
      %v2481 = vadd.f32 %v2279, %v2480
      %v2482 = vpop.f32.mrb[0].mxu0
      %v2483 = vadd.f32 %v2283, %v2482
      %v2484 = vpop.f32.mrb[0].mxu0
      %v2485 = vadd.f32 %v2279, %v2484
      %v2486 = vpop.f32.mrb[0].mxu0
      %v2487 = vadd.f32 %v2283, %v2486
      %2488 = vmatprep.mubr.bf16.mxu0 %v2241
      %2489 = vmatmul.mubr.bf16.gmra.mrb[0].mxu0 %v2240
      %v2490 = vpop.f32.mrb[0].mxu0
      %v2491 = vadd.f32 %v2279, %v2490
      %v2492 = vpop.f32.mrb[0].mxu0
      %v2493 = vadd.f32 %v2283, %v2492
      %v2494 = vpop.f32.mrb[0].mxu0
      %v2495 = vadd.f32 %v2279, %v2494
      %v2496 = vpop.f32.mrb[0].mxu0
      %v2497 = vadd.f32 %v2283, %v2496
      %2498 = vdwg.mxu0
      %v2499 = vmax.f32 %v2481, 0.0
      %v2500 = vmax.f32 %v2483, 0.0
      %v2501 = vmax.f32 %v2485, 0.0
      %v2502 = vmax.f32 %v2487, 0.0
      %v2503 = vmax.f32 %v2491, 0.0
      %v2504 = vmax.f32 %v2493, 0.0
      %v2505 = vmax.f32 %v2495, 0.0
      %v2506 = vmax.f32 %v2497, 0.0
      %v2507 = vpack.c.bf16 %v2501, %v2499
      %v2508 = vpack.c.bf16 %v2502, %v2500
      %v2509 = vpack.c.bf16 %v2505, %v2503
      %v2510 = vpack.c.bf16 %v2506, %v2504
      %v2511 = vld [vmem:[%s1 + $0x900] sm:$0xff]
      %v2512 = vld [vmem:[%s1 + $0x90c] sm:$0xff]
      %v2513 = vld [vmem:[%s1 + $0x918] sm:$0xff]
      %v2514 = vld [vmem:[%s1 + $0x924] sm:$0xff]
      %v2515 = vld [vmem:[%s1 + $0x930] sm:$0xff]
      %v2516 = vld [vmem:[%s1 + $0x93c] sm:$0xff]
      %v2517 = vld [vmem:[%s1 + $0x948] sm:$0xff]
      %v2518 = vld [vmem:[%s1 + $0x954] sm:$0xff]
      %v2519 = vld [vmem:[%s1 + $0x960] sm:$0xff]
      %v2520 = vld [vmem:[%s1 + $0x96c] sm:$0xff]
      %v2521 = vld [vmem:[%s1 + $0x978] sm:$0xff]
      %v2522 = vld [vmem:[%s1 + $0x984] sm:$0xff]
      %v2523 = vld [vmem:[%s1 + $0x990] sm:$0xff]
      %v2524 = vld [vmem:[%s1 + $0x99c] sm:$0xff]
      %v2525 = vld [vmem:[%s1 + $0x9a8] sm:$0xff]
      %v2526 = vld [vmem:[%s1 + $0x9b4] sm:$0xff]
      %v2527 = vld [vmem:[%s1 + $0x9c0] sm:$0xff]
      %v2528 = vld [vmem:[%s1 + $0x9cc] sm:$0xff]
      %v2529 = vld [vmem:[%s1 + $0x9d8] sm:$0xff]
      %v2530 = vld [vmem:[%s1 + $0x9e4] sm:$0xff]
      %v2531 = vld [vmem:[%s1 + $0x9f0] sm:$0xff]
      %v2532 = vld [vmem:[%s1 + $0x9fc] sm:$0xff]
      %v2533 = vld [vmem:[%s1 + $0xa08] sm:$0xff]
      %v2534 = vld [vmem:[%s1 + $0xa14] sm:$0xff]
      %v2535 = vld [vmem:[%s1 + $0xa20] sm:$0xff]
      %v2536 = vld [vmem:[%s1 + $0xa2c] sm:$0xff]
      %v2537 = vld [vmem:[%s1 + $0xa38] sm:$0xff]
      %v2538 = vld [vmem:[%s1 + $0xa44] sm:$0xff]
      %v2539 = vld [vmem:[%s1 + $0xa50] sm:$0xff]
      %v2540 = vld [vmem:[%s1 + $0xa5c] sm:$0xff]
      %v2541 = vld [vmem:[%s1 + $0xa68] sm:$0xff]
      %v2542 = vld [vmem:[%s1 + $0xa74] sm:$0xff]
      %v2543 = vld [vmem:[%s2 + $0xa] sm:$0x3]
      %v2545 = vlaneseq
      %v2546 = vshrl.u32 %v2545, 7
      %v2547 = vsub.s32 0, %v2546
      %v2548 = vrot.slane %v2543, %v2547
      %v2549 = vlaneseq
      %v2550 = vshrl.u32 %v2549, 7
      %v2551 = vsub.s32 1, %v2550
      %v2552 = vrot.slane %v2543, %v2551
      %v2587 = vunpack.c.l.b16 %v2511
      %v2588 = vunpack.c.h.b16 %v2511
      %v2589 = vunpack.c.l.b16 %v2512
      %v2590 = vunpack.c.h.b16 %v2512
      %v2591 = vunpack.c.l.b16 %v2513
      %v2592 = vunpack.c.h.b16 %v2513
      %v2593 = vunpack.c.l.b16 %v2514
      %v2594 = vunpack.c.h.b16 %v2514
      %v2595 = vunpack.c.l.b16 %v2515
      %v2596 = vunpack.c.h.b16 %v2515
      %v2597 = vunpack.c.l.b16 %v2516
      %v2598 = vunpack.c.h.b16 %v2516
      %v2599 = vunpack.c.l.b16 %v2517
      %v2600 = vunpack.c.h.b16 %v2517
      %v2601 = vunpack.c.l.b16 %v2518
      %v2602 = vunpack.c.h.b16 %v2518
      %v2603 = vunpack.c.l.b16 %v2519
      %v2604 = vunpack.c.h.b16 %v2519
      %v2605 = vunpack.c.l.b16 %v2520
      %v2606 = vunpack.c.h.b16 %v2520
      %v2607 = vunpack.c.l.b16 %v2521
      %v2608 = vunpack.c.h.b16 %v2521
      %v2609 = vunpack.c.l.b16 %v2522
      %v2610 = vunpack.c.h.b16 %v2522
      %v2611 = vunpack.c.l.b16 %v2523
      %v2612 = vunpack.c.h.b16 %v2523
      %v2613 = vunpack.c.l.b16 %v2524
      %v2614 = vunpack.c.h.b16 %v2524
      %v2615 = vunpack.c.l.b16 %v2525
      %v2616 = vunpack.c.h.b16 %v2525
      %v2617 = vunpack.c.l.b16 %v2526
      %v2618 = vunpack.c.h.b16 %v2526
      %v2619 = vunpack.c.l.b16 %v2527
      %v2620 = vunpack.c.h.b16 %v2527
      %v2621 = vunpack.c.l.b16 %v2528
      %v2622 = vunpack.c.h.b16 %v2528
      %v2623 = vunpack.c.l.b16 %v2529
      %v2624 = vunpack.c.h.b16 %v2529
      %v2625 = vunpack.c.l.b16 %v2530
      %v2626 = vunpack.c.h.b16 %v2530
      %v2627 = vunpack.c.l.b16 %v2531
      %v2628 = vunpack.c.h.b16 %v2531
      %v2629 = vunpack.c.l.b16 %v2532
      %v2630 = vunpack.c.h.b16 %v2532
      %v2631 = vunpack.c.l.b16 %v2533
      %v2632 = vunpack.c.h.b16 %v2533
      %v2633 = vunpack.c.l.b16 %v2534
      %v2634 = vunpack.c.h.b16 %v2534
      %v2635 = vunpack.c.l.b16 %v2535
      %v2636 = vunpack.c.h.b16 %v2535
      %v2637 = vunpack.c.l.b16 %v2536
      %v2638 = vunpack.c.h.b16 %v2536
      %v2639 = vunpack.c.l.b16 %v2537
      %v2640 = vunpack.c.h.b16 %v2537
      %v2641 = vunpack.c.l.b16 %v2538
      %v2642 = vunpack.c.h.b16 %v2538
      %v2643 = vunpack.c.l.b16 %v2539
      %v2644 = vunpack.c.h.b16 %v2539
      %v2645 = vunpack.c.l.b16 %v2540
      %v2646 = vunpack.c.h.b16 %v2540
      %v2647 = vunpack.c.l.b16 %v2541
      %v2648 = vunpack.c.h.b16 %v2541
      %v2649 = vunpack.c.l.b16 %v2542
      %v2650 = vunpack.c.h.b16 %v2542
      %v2651 = vpack.c.b16 %v2589, %v2587
      %v2652 = vpack.c.b16 %v2590, %v2588
      %v2653 = vpack.c.b16 %v2593, %v2591
      %v2654 = vpack.c.b16 %v2594, %v2592
      %v2655 = vpack.c.b16 %v2597, %v2595
      %v2656 = vpack.c.b16 %v2598, %v2596
      %v2657 = vpack.c.b16 %v2601, %v2599
      %v2658 = vpack.c.b16 %v2602, %v2600
      %v2659 = vpack.c.b16 %v2605, %v2603
      %v2660 = vpack.c.b16 %v2606, %v2604
      %v2661 = vpack.c.b16 %v2609, %v2607
      %v2662 = vpack.c.b16 %v2610, %v2608
      %v2663 = vpack.c.b16 %v2613, %v2611
      %v2664 = vpack.c.b16 %v2614, %v2612
      %v2665 = vpack.c.b16 %v2617, %v2615
      %v2666 = vpack.c.b16 %v2618, %v2616
      %v2667 = vpack.c.b16 %v2621, %v2619
      %v2668 = vpack.c.b16 %v2622, %v2620
      %v2669 = vpack.c.b16 %v2625, %v2623
      %v2670 = vpack.c.b16 %v2626, %v2624
      %v2671 = vpack.c.b16 %v2629, %v2627
      %v2672 = vpack.c.b16 %v2630, %v2628
      %v2673 = vpack.c.b16 %v2633, %v2631
      %v2674 = vpack.c.b16 %v2634, %v2632
      %v2675 = vpack.c.b16 %v2637, %v2635
      %v2676 = vpack.c.b16 %v2638, %v2636
      %v2677 = vpack.c.b16 %v2641, %v2639
      %v2678 = vpack.c.b16 %v2642, %v2640
      %v2679 = vpack.c.b16 %v2645, %v2643
      %v2680 = vpack.c.b16 %v2646, %v2644
      %v2681 = vpack.c.b16 %v2649, %v2647
      %v2682 = vpack.c.b16 %v2650, %v2648
      %2715 = vmatprep.subr.bf16.mxu0 %v2652
      %2716 = vmatpush1.bf16.msra.mxu0 %v2651
      %2717 = vmatprep.subr.bf16.mxu0 %v2654
      %2718 = vmatpush1.bf16.msra.mxu0 %v2653
      %2719 = vmatprep.subr.bf16.mxu0 %v2656
      %2720 = vmatpush1.bf16.msra.mxu0 %v2655
      %2721 = vmatprep.subr.bf16.mxu0 %v2658
      %2722 = vmatpush1.bf16.msra.mxu0 %v2657
      %2723 = vmatprep.subr.bf16.mxu0 %v2660
      %2724 = vmatpush1.bf16.msra.mxu0 %v2659
      %2725 = vmatprep.subr.bf16.mxu0 %v2662
      %2726 = vmatpush1.bf16.msra.mxu0 %v2661
      %2727 = vmatprep.subr.bf16.mxu0 %v2664
      %2728 = vmatpush1.bf16.msra.mxu0 %v2663
      %2729 = vmatprep.subr.bf16.mxu0 %v2666
      %2730 = vmatpush1.bf16.msra.mxu0 %v2665
      %2731 = vmatprep.subr.bf16.mxu0 %v2668
      %2732 = vmatpush1.bf16.msra.mxu0 %v2667
      %2733 = vmatprep.subr.bf16.mxu0 %v2670
      %2734 = vmatpush1.bf16.msra.mxu0 %v2669
      %2735 = vmatprep.subr.bf16.mxu0 %v2672
      %2736 = vmatpush1.bf16.msra.mxu0 %v2671
      %2737 = vmatprep.subr.bf16.mxu0 %v2674
      %2738 = vmatpush1.bf16.msra.mxu0 %v2673
      %2739 = vmatprep.subr.bf16.mxu0 %v2676
      %2740 = vmatpush1.bf16.msra.mxu0 %v2675
      %2741 = vmatprep.subr.bf16.mxu0 %v2678
      %2742 = vmatpush1.bf16.msra.mxu0 %v2677
      %2743 = vmatprep.subr.bf16.mxu0 %v2680
      %2744 = vmatpush1.bf16.msra.mxu0 %v2679
      %2745 = vmatprep.subr.bf16.mxu0 %v2682
      %2746 = vmatpush1.bf16.msra.mxu0 %v2681
      %2747 = vmatprep.mubr.bf16.mxu0 %v2508
      %2748 = vmatmul.mubr.bf16.gmra.mrb[0].mxu0 %v2507
      %v2749 = vpop.f32.mrb[0].mxu0
      %v2750 = vadd.f32 %v2548, %v2749
      %v2751 = vpop.f32.mrb[0].mxu0
      %v2752 = vadd.f32 %v2552, %v2751
      %v2753 = vpop.f32.mrb[0].mxu0
      %v2754 = vadd.f32 %v2548, %v2753
      %v2755 = vpop.f32.mrb[0].mxu0
      %v2756 = vadd.f32 %v2552, %v2755
      %2757 = vmatprep.mubr.bf16.mxu0 %v2510
      %2758 = vmatmul.mubr.bf16.gmra.mrb[0].mxu0 %v2509
      %v2759 = vpop.f32.mrb[0].mxu0
      %v2760 = vadd.f32 %v2548, %v2759
      %v2761 = vpop.f32.mrb[0].mxu0
      %v2762 = vadd.f32 %v2552, %v2761
      %v2763 = vpop.f32.mrb[0].mxu0
      %v2764 = vadd.f32 %v2548, %v2763
      %v2765 = vpop.f32.mrb[0].mxu0
      %v2766 = vadd.f32 %v2552, %v2765
      %2767 = vdwg.mxu0
      %v2768 = vmax.f32 %v2750, 0.0
      %v2769 = vmax.f32 %v2752, 0.0
      %v2770 = vmax.f32 %v2754, 0.0
      %v2771 = vmax.f32 %v2756, 0.0
      %v2772 = vmax.f32 %v2760, 0.0
      %v2773 = vmax.f32 %v2762, 0.0
      %v2774 = vmax.f32 %v2764, 0.0
      %v2775 = vmax.f32 %v2766, 0.0
      %v2776 = vpack.c.bf16 %v2770, %v2768
      %v2777 = vpack.c.bf16 %v2771, %v2769
      %v2778 = vpack.c.bf16 %v2774, %v2772
      %v2779 = vpack.c.bf16 %v2775, %v2773
      %v2780 = vld [vmem:[%s1 + $0xa80] sm:$0xf]
      %v2781 = vld [vmem:[%s1 + $0xa8c] sm:$0xf]
      %v2782 = vld [vmem:[%s1 + $0xa98] sm:$0xf]
      %v2783 = vld [vmem:[%s1 + $0xaa4] sm:$0xf]
      %v2784 = vld [vmem:[%s1 + $0xab0] sm:$0xf]
      %v2785 = vld [vmem:[%s1 + $0xabc] sm:$0xf]
      %v2786 = vld [vmem:[%s1 + $0xac8] sm:$0xf]
      %v2787 = vld [vmem:[%s1 + $0xad4] sm:$0xf]
      %v2788 = vld [vmem:[%s1 + $0xae0] sm:$0xf]
      %v2789 = vld [vmem:[%s1 + $0xaec] sm:$0xf]
      %v2790 = vld [vmem:[%s1 + $0xaf8] sm:$0xf]
      %v2791 = vld [vmem:[%s1 + $0xb04] sm:$0xf]
      %v2792 = vld [vmem:[%s1 + $0xb10] sm:$0xf]
      %v2793 = vld [vmem:[%s1 + $0xb1c] sm:$0xf]
      %v2794 = vld [vmem:[%s1 + $0xb28] sm:$0xf]
      %v2795 = vld [vmem:[%s1 + $0xb34] sm:$0xf]
      %v2796 = vld [vmem:[%s1 + $0xb40] sm:$0xf]
      %v2797 = vld [vmem:[%s1 + $0xb4c] sm:$0xf]
      %v2798 = vld [vmem:[%s1 + $0xb58] sm:$0xf]
      %v2799 = vld [vmem:[%s1 + $0xb64] sm:$0xf]
      %v2800 = vld [vmem:[%s1 + $0xb70] sm:$0xf]
      %v2801 = vld [vmem:[%s1 + $0xb7c] sm:$0xf]
      %v2802 = vld [vmem:[%s1 + $0xb88] sm:$0xf]
      %v2803 = vld [vmem:[%s1 + $0xb94] sm:$0xf]
      %v2804 = vld [vmem:[%s1 + $0xba0] sm:$0xf]
      %v2805 = vld [vmem:[%s1 + $0xbac] sm:$0xf]
      %v2806 = vld [vmem:[%s1 + $0xbb8] sm:$0xf]
      %v2807 = vld [vmem:[%s1 + $0xbc4] sm:$0xf]
      %v2808 = vld [vmem:[%s1 + $0xbd0] sm:$0xf]
      %v2809 = vld [vmem:[%s1 + $0xbdc] sm:$0xf]
      %v2810 = vld [vmem:[%s1 + $0xbe8] sm:$0xf]
      %v2811 = vld [vmem:[%s1 + $0xbf4] sm:$0xf]
      %v2812 = vld [vmem:[%s2 + $0xc] sm:$0x1]
      %v2814 = vlaneseq
      %v2815 = vshrl.u32 %v2814, 7
      %v2816 = vsub.s32 0, %v2815
      %v2817 = vrot.slane %v2812, %v2816
      %v2851 = vunpack.c.l.b16 %v2780
      %v2852 = vunpack.c.l.b16 %v2781
      %v2853 = vunpack.c.l.b16 %v2782
      %v2854 = vunpack.c.l.b16 %v2783
      %v2855 = vunpack.c.l.b16 %v2784
      %v2856 = vunpack.c.l.b16 %v2785
      %v2857 = vunpack.c.l.b16 %v2786
      %v2858 = vunpack.c.l.b16 %v2787
      %v2859 = vunpack.c.l.b16 %v2788
      %v2860 = vunpack.c.l.b16 %v2789
      %v2861 = vunpack.c.l.b16 %v2790
      %v2862 = vunpack.c.l.b16 %v2791
      %v2863 = vunpack.c.l.b16 %v2792
      %v2864 = vunpack.c.l.b16 %v2793
      %v2865 = vunpack.c.l.b16 %v2794
      %v2866 = vunpack.c.l.b16 %v2795
      %v2867 = vunpack.c.l.b16 %v2796
      %v2868 = vunpack.c.l.b16 %v2797
      %v2869 = vunpack.c.l.b16 %v2798
      %v2870 = vunpack.c.l.b16 %v2799
      %v2871 = vunpack.c.l.b16 %v2800
      %v2872 = vunpack.c.l.b16 %v2801
      %v2873 = vunpack.c.l.b16 %v2802
      %v2874 = vunpack.c.l.b16 %v2803
      %v2875 = vunpack.c.l.b16 %v2804
      %v2876 = vunpack.c.l.b16 %v2805
      %v2877 = vunpack.c.l.b16 %v2806
      %v2878 = vunpack.c.l.b16 %v2807
      %v2879 = vunpack.c.l.b16 %v2808
      %v2880 = vunpack.c.l.b16 %v2809
      %v2881 = vunpack.c.l.b16 %v2810
      %v2882 = vunpack.c.l.b16 %v2811
      %v2883 = vpack.c.b16 %v2852, %v2851
      %v2884 = vpack.c.b16 %v2854, %v2853
      %v2885 = vpack.c.b16 %v2856, %v2855
      %v2886 = vpack.c.b16 %v2858, %v2857
      %v2887 = vpack.c.b16 %v2860, %v2859
      %v2888 = vpack.c.b16 %v2862, %v2861
      %v2889 = vpack.c.b16 %v2864, %v2863
      %v2890 = vpack.c.b16 %v2866, %v2865
      %v2891 = vpack.c.b16 %v2868, %v2867
      %v2892 = vpack.c.b16 %v2870, %v2869
      %v2893 = vpack.c.b16 %v2872, %v2871
      %v2894 = vpack.c.b16 %v2874, %v2873
      %v2895 = vpack.c.b16 %v2876, %v2875
      %v2896 = vpack.c.b16 %v2878, %v2877
      %v2897 = vpack.c.b16 %v2880, %v2879
      %v2898 = vpack.c.b16 %v2882, %v2881
      %2915 = vmatprep.subr.bf16.mxu0 0
      %2916 = vmatpush1.bf16.msra.mxu0 %v2883
      %2917 = vmatprep.subr.bf16.mxu0 0
      %2918 = vmatpush1.bf16.msra.mxu0 %v2884
      %2919 = vmatprep.subr.bf16.mxu0 0
      %2920 = vmatpush1.bf16.msra.mxu0 %v2885
      %2921 = vmatprep.subr.bf16.mxu0 0
      %2922 = vmatpush1.bf16.msra.mxu0 %v2886
      %2923 = vmatprep.subr.bf16.mxu0 0
      %2924 = vmatpush1.bf16.msra.mxu0 %v2887
      %2925 = vmatprep.subr.bf16.mxu0 0
      %2926 = vmatpush1.bf16.msra.mxu0 %v2888
      %2927 = vmatprep.subr.bf16.mxu0 0
      %2928 = vmatpush1.bf16.msra.mxu0 %v2889
      %2929 = vmatprep.subr.bf16.mxu0 0
      %2930 = vmatpush1.bf16.msra.mxu0 %v2890
      %2931 = vmatprep.subr.bf16.mxu0 0
      %2932 = vmatpush1.bf16.msra.mxu0 %v2891
      %2933 = vmatprep.subr.bf16.mxu0 0
      %2934 = vmatpush1.bf16.msra.mxu0 %v2892
      %2935 = vmatprep.subr.bf16.mxu0 0
      %2936 = vmatpush1.bf16.msra.mxu0 %v2893
      %2937 = vmatprep.subr.bf16.mxu0 0
      %2938 = vmatpush1.bf16.msra.mxu0 %v2894
      %2939 = vmatprep.subr.bf16.mxu0 0
      %2940 = vmatpush1.bf16.msra.mxu0 %v2895
      %2941 = vmatprep.subr.bf16.mxu0 0
      %2942 = vmatpush1.bf16.msra.mxu0 %v2896
      %2943 = vmatprep.subr.bf16.mxu0 0
      %2944 = vmatpush1.bf16.msra.mxu0 %v2897
      %2945 = vmatprep.subr.bf16.mxu0 0
      %2946 = vmatpush1.bf16.msra.mxu0 %v2898
      %2947 = vmatprep.mubr.bf16.mxu0 %v2777
      %2948 = vmatmul.mubr.bf16.gmra.mrb[0].mxu0 %v2776
      %v2949 = vpop.f32.mrb[0].mxu0
      %v2950 = vadd.f32 %v2817, %v2949
      %v2951 = vpop.f32.mrb[0].mxu0
      %v2952 = vpop.f32.mrb[0].mxu0
      %v2953 = vadd.f32 %v2817, %v2952
      %v2954 = vpop.f32.mrb[0].mxu0
      %2955 = vmatprep.mubr.bf16.mxu0 %v2779
      %2956 = vmatmul.mubr.bf16.gmra.mrb[0].mxu0 %v2778
      %v2957 = vpop.f32.mrb[0].mxu0
      %v2958 = vadd.f32 %v2817, %v2957
      %v2959 = vpop.f32.mrb[0].mxu0
      %v2960 = vpop.f32.mrb[0].mxu0
      %v2961 = vadd.f32 %v2817, %v2960
      %v2962 = vpop.f32.mrb[0].mxu0
      %2963 = vdwg.mxu0
      %v2964 = vmax.f32 %v2950, 0.0
      %v2965 = vmax.f32 %v2953, 0.0
      %v2966 = vmax.f32 %v2958, 0.0
      %v2967 = vmax.f32 %v2961, 0.0
      %v2968 = vpack.c.bf16 %v2965, %v2964
      %v2969 = vpack.c.bf16 %v2967, %v2966
      %v2970 = vld [vmem:[%s1 + $0xc00] sm:$0xf]
      %v2971 = vld [vmem:[%s1 + $0xc0c] sm:$0xf]
      %v2972 = vld [vmem:[%s1 + $0xc18] sm:$0xf]
      %v2973 = vld [vmem:[%s1 + $0xc24] sm:$0xf]
      %v2974 = vld [vmem:[%s1 + $0xc30] sm:$0xf]
      %v2975 = vld [vmem:[%s1 + $0xc3c] sm:$0xf]
      %v2976 = vld [vmem:[%s1 + $0xc48] sm:$0xf]
      %v2977 = vld [vmem:[%s1 + $0xc54] sm:$0xf]
      %v2978 = vld [vmem:[%s1 + $0xc60] sm:$0xf]
      %v2979 = vld [vmem:[%s1 + $0xc6c] sm:$0xf]
      %v2980 = vld [vmem:[%s1 + $0xc78] sm:$0xf]
      %v2981 = vld [vmem:[%s1 + $0xc84] sm:$0xf]
      %v2982 = vld [vmem:[%s1 + $0xc90] sm:$0xf]
      %v2983 = vld [vmem:[%s1 + $0xc9c] sm:$0xf]
      %v2984 = vld [vmem:[%s1 + $0xca8] sm:$0xf]
      %v2985 = vld [vmem:[%s1 + $0xcb4] sm:$0xf]
      %v2986 = vld [vmem:[%s2 + $0xd] sm:$0x1]
      %v2988 = vlaneseq
      %v2989 = vshrl.u32 %v2988, 7
      %v2990 = vsub.s32 0, %v2989
      %v2991 = vrot.slane %v2986, %v2990
      %v3009 = vunpack.c.l.b16 %v2970
      %v3010 = vunpack.c.l.b16 %v2971
      %v3011 = vunpack.c.l.b16 %v2972
      %v3012 = vunpack.c.l.b16 %v2973
      %v3013 = vunpack.c.l.b16 %v2974
      %v3014 = vunpack.c.l.b16 %v2975
      %v3015 = vunpack.c.l.b16 %v2976
      %v3016 = vunpack.c.l.b16 %v2977
      %v3017 = vunpack.c.l.b16 %v2978
      %v3018 = vunpack.c.l.b16 %v2979
      %v3019 = vunpack.c.l.b16 %v2980
      %v3020 = vunpack.c.l.b16 %v2981
      %v3021 = vunpack.c.l.b16 %v2982
      %v3022 = vunpack.c.l.b16 %v2983
      %v3023 = vunpack.c.l.b16 %v2984
      %v3024 = vunpack.c.l.b16 %v2985
      %v3025 = vpack.c.b16 %v3010, %v3009
      %v3026 = vpack.c.b16 %v3012, %v3011
      %v3027 = vpack.c.b16 %v3014, %v3013
      %v3028 = vpack.c.b16 %v3016, %v3015
      %v3029 = vpack.c.b16 %v3018, %v3017
      %v3030 = vpack.c.b16 %v3020, %v3019
      %v3031 = vpack.c.b16 %v3022, %v3021
      %v3032 = vpack.c.b16 %v3024, %v3023
      %3041 = vmatprep.subr.bf16.mxu0 0
      %3042 = vmatpush1.bf16.msra.mxu0 %v3025
      %3043 = vmatprep.subr.bf16.mxu0 0
      %3044 = vmatpush1.bf16.msra.mxu0 %v3026
      %3045 = vmatprep.subr.bf16.mxu0 0
      %3046 = vmatpush1.bf16.msra.mxu0 %v3027
      %3047 = vmatprep.subr.bf16.mxu0 0
      %3048 = vmatpush1.bf16.msra.mxu0 %v3028
      %3049 = vmatprep.subr.bf16.mxu0 0
      %3050 = vmatpush1.bf16.msra.mxu0 %v3029
      %3051 = vmatprep.subr.bf16.mxu0 0
      %3052 = vmatpush1.bf16.msra.mxu0 %v3030
      %3053 = vmatprep.subr.bf16.mxu0 0
      %3054 = vmatpush1.bf16.msra.mxu0 %v3031
      %3055 = vmatprep.subr.bf16.mxu0 0
      %3056 = vmatpush1.bf16.msra.mxu0 %v3032
      %3057 = vmatprep.subr.bf16.mxu0 0
      %3058 = vmatpush1.bf16.msra.mxu0 0
      %3059 = vmatprep.subr.bf16.mxu0 0
      %3060 = vmatpush1.bf16.msra.mxu0 0
      %3061 = vmatprep.subr.bf16.mxu0 0
      %3062 = vmatpush1.bf16.msra.mxu0 0
      %3063 = vmatprep.subr.bf16.mxu0 0
      %3064 = vmatpush1.bf16.msra.mxu0 0
      %3065 = vmatprep.subr.bf16.mxu0 0
      %3066 = vmatpush1.bf16.msra.mxu0 0
      %3067 = vmatprep.subr.bf16.mxu0 0
      %3068 = vmatpush1.bf16.msra.mxu0 0
      %3069 = vmatprep.subr.bf16.mxu0 0
      %3070 = vmatpush1.bf16.msra.mxu0 0
      %3071 = vmatprep.subr.bf16.mxu0 0
      %3072 = vmatpush1.bf16.msra.mxu0 0
      %3073 = vmatprep.mubr.bf16.mxu0 0
      %3074 = vmatmul.mubr.bf16.gmra.mrb[0].mxu0 %v2968
      %v3075 = vpop.f32.mrb[0].mxu0
      %v3076 = vadd.f32 %v2991, %v3075
      %v3077 = vpop.f32.mrb[0].mxu0
      %v3078 = vpop.f32.mrb[0].mxu0
      %v3079 = vadd.f32 %v2991, %v3078
      %v3080 = vpop.f32.mrb[0].mxu0
      %3081 = vmatprep.mubr.bf16.mxu0 0
      %3082 = vmatmul.mubr.bf16.gmra.mrb[0].mxu0 %v2969
      %v3083 = vpop.f32.mrb[0].mxu0
      %v3084 = vadd.f32 %v2991, %v3083
      %v3085 = vpop.f32.mrb[0].mxu0
      %v3086 = vpop.f32.mrb[0].mxu0
      %v3087 = vadd.f32 %v2991, %v3086
      %v3088 = vpop.f32.mrb[0].mxu0
      %3089 = vdwg.mxu0
      %v3090 = vmax.f32 %v3076, 0.0
      %v3091 = vmax.f32 %v3079, 0.0
      %v3092 = vmax.f32 %v3084, 0.0
      %v3093 = vmax.f32 %v3087, 0.0
      %v3094 = vmin.f32 %v3090, 6.0
      %v3095 = vmin.f32 %v3091, 6.0
      %v3096 = vmin.f32 %v3092, 6.0
      %v3097 = vmin.f32 %v3093, 6.0
      %v3098 = vpack.c.bf16 %v3095, %v3094
      %v3099 = vpack.c.bf16 %v3097, %v3096
      %v3100 = vld [vmem:[%s1 + $0xcc0] sm:$0xf]
      %v3101 = vld [vmem:[%s1 + $0xccc] sm:$0xf]
      %v3102 = vld [vmem:[%s1 + $0xcd8] sm:$0xf]
      %v3103 = vld [vmem:[%s1 + $0xce4] sm:$0xf]
      %v3104 = vld [vmem:[%s1 + $0xcf0] sm:$0xf]
      %v3105 = vld [vmem:[%s1 + $0xcfc] sm:$0xf]
      %v3106 = vld [vmem:[%s1 + $0xd08] sm:$0xf]
      %v3107 = vld [vmem:[%s1 + $0xd14] sm:$0xf]
      %v3108 = vld [vmem:[%s1 + $0xd20] sm:$0xf]
      %v3109 = vld [vmem:[%s1 + $0xd2c] sm:$0xf]
      %v3110 = vld [vmem:[%s1 + $0xd38] sm:$0xf]
      %v3111 = vld [vmem:[%s1 + $0xd44] sm:$0xf]
      %v3112 = vld [vmem:[%s1 + $0xd50] sm:$0xf]
      %v3113 = vld [vmem:[%s1 + $0xd5c] sm:$0xf]
      %v3114 = vld [vmem:[%s1 + $0xd68] sm:$0xf]
      %v3115 = vld [vmem:[%s1 + $0xd74] sm:$0xf]
      %v3116 = vld [vmem:[%s2 + $0xe] sm:$0x1]
      %v3118 = vlaneseq
      %v3119 = vshrl.u32 %v3118, 7
      %v3120 = vsub.s32 0, %v3119
      %v3121 = vrot.slane %v3116, %v3120
      %v3139 = vunpack.c.l.b16 %v3100
      %v3140 = vunpack.c.l.b16 %v3101
      %v3141 = vunpack.c.l.b16 %v3102
      %v3142 = vunpack.c.l.b16 %v3103
      %v3143 = vunpack.c.l.b16 %v3104
      %v3144 = vunpack.c.l.b16 %v3105
      %v3145 = vunpack.c.l.b16 %v3106
      %v3146 = vunpack.c.l.b16 %v3107
      %v3147 = vunpack.c.l.b16 %v3108
      %v3148 = vunpack.c.l.b16 %v3109
      %v3149 = vunpack.c.l.b16 %v3110
      %v3150 = vunpack.c.l.b16 %v3111
      %v3151 = vunpack.c.l.b16 %v3112
      %v3152 = vunpack.c.l.b16 %v3113
      %v3153 = vunpack.c.l.b16 %v3114
      %v3154 = vunpack.c.l.b16 %v3115
      %v3155 = vpack.c.b16 %v3140, %v3139
      %v3156 = vpack.c.b16 %v3142, %v3141
      %v3157 = vpack.c.b16 %v3144, %v3143
      %v3158 = vpack.c.b16 %v3146, %v3145
      %v3159 = vpack.c.b16 %v3148, %v3147
      %v3160 = vpack.c.b16 %v3150, %v3149
      %v3161 = vpack.c.b16 %v3152, %v3151
      %v3162 = vpack.c.b16 %v3154, %v3153
      %3171 = vmatprep.subr.bf16.mxu0 0
      %3172 = vmatpush1.bf16.msra.mxu0 %v3155
      %3173 = vmatprep.subr.bf16.mxu0 0
      %3174 = vmatpush1.bf16.msra.mxu0 %v3156
      %3175 = vmatprep.subr.bf16.mxu0 0
      %3176 = vmatpush1.bf16.msra.mxu0 %v3157
      %3177 = vmatprep.subr.bf16.mxu0 0
      %3178 = vmatpush1.bf16.msra.mxu0 %v3158
      %3179 = vmatprep.subr.bf16.mxu0 0
      %3180 = vmatpush1.bf16.msra.mxu0 %v3159
      %3181 = vmatprep.subr.bf16.mxu0 0
      %3182 = vmatpush1.bf16.msra.mxu0 %v3160
      %3183 = vmatprep.subr.bf16.mxu0 0
      %3184 = vmatpush1.bf16.msra.mxu0 %v3161
      %3185 = vmatprep.subr.bf16.mxu0 0
      %3186 = vmatpush1.bf16.msra.mxu0 %v3162
      %3187 = vmatprep.subr.bf16.mxu0 0
      %3188 = vmatpush1.bf16.msra.mxu0 0
      %3189 = vmatprep.subr.bf16.mxu0 0
      %3190 = vmatpush1.bf16.msra.mxu0 0
      %3191 = vmatprep.subr.bf16.mxu0 0
      %3192 = vmatpush1.bf16.msra.mxu0 0
      %3193 = vmatprep.subr.bf16.mxu0 0
      %3194 = vmatpush1.bf16.msra.mxu0 0
      %3195 = vmatprep.subr.bf16.mxu0 0
      %3196 = vmatpush1.bf16.msra.mxu0 0
      %3197 = vmatprep.subr.bf16.mxu0 0
      %3198 = vmatpush1.bf16.msra.mxu0 0
      %3199 = vmatprep.subr.bf16.mxu0 0
      %3200 = vmatpush1.bf16.msra.mxu0 0
      %3201 = vmatprep.subr.bf16.mxu0 0
      %3202 = vmatpush1.bf16.msra.mxu0 0
      %3203 = vmatprep.mubr.bf16.mxu0 0
      %3204 = vmatmul.mubr.bf16.gmra.mrb[0].mxu0 %v3098
      %v3205 = vpop.f32.mrb[0].mxu0
      %v3206 = vadd.f32 %v3121, %v3205
      %v3207 = vpop.f32.mrb[0].mxu0
      %v3208 = vpop.f32.mrb[0].mxu0
      %v3209 = vadd.f32 %v3121, %v3208
      %v3210 = vpop.f32.mrb[0].mxu0
      %3211 = vmatprep.mubr.bf16.mxu0 0
      %3212 = vmatmul.mubr.bf16.gmra.mrb[0].mxu0 %v3099
      %v3213 = vpop.f32.mrb[0].mxu0
      %v3214 = vadd.f32 %v3121, %v3213
      %v3215 = vpop.f32.mrb[0].mxu0
      %v3216 = vpop.f32.mrb[0].mxu0
      %v3217 = vadd.f32 %v3121, %v3216
      %v3218 = vpop.f32.mrb[0].mxu0
      %3219 = vdwg.mxu0
      %v3220 = vmax.f32 %v3206, 0.0
      %v3221 = vmax.f32 %v3209, 0.0
      %v3222 = vmax.f32 %v3214, 0.0
      %v3223 = vmax.f32 %v3217, 0.0
      %v3224 = vmin.f32 %v3220, 6.0
      %v3225 = vmin.f32 %v3221, 6.0
      %v3226 = vmin.f32 %v3222, 6.0
      %v3227 = vmin.f32 %v3223, 6.0
      %v3228 = vpack.c.bf16 %v3225, %v3224
      %v3229 = vpack.c.bf16 %v3227, %v3226
      %v3230 = vld [vmem:[%s1 + $0xd80] sm:$0xf]
      %v3231 = vld [vmem:[%s1 + $0xd8c] sm:$0xf]
      %v3232 = vld [vmem:[%s1 + $0xd98] sm:$0xf]
      %v3233 = vld [vmem:[%s1 + $0xda4] sm:$0xf]
      %v3234 = vld [vmem:[%s1 + $0xdb0] sm:$0xf]
      %v3235 = vld [vmem:[%s1 + $0xdbc] sm:$0xf]
      %v3236 = vld [vmem:[%s1 + $0xdc8] sm:$0xf]
      %v3237 = vld [vmem:[%s1 + $0xdd4] sm:$0xf]
      %v3238 = vld [vmem:[%s1 + $0xde0] sm:$0xf]
      %v3239 = vld [vmem:[%s1 + $0xdec] sm:$0xf]
      %v3240 = vld [vmem:[%s1 + $0xdf8] sm:$0xf]
      %v3241 = vld [vmem:[%s1 + $0xe04] sm:$0xf]
      %v3242 = vld [vmem:[%s1 + $0xe10] sm:$0xf]
      %v3243 = vld [vmem:[%s1 + $0xe1c] sm:$0xf]
      %v3244 = vld [vmem:[%s1 + $0xe28] sm:$0xf]
      %v3245 = vld [vmem:[%s1 + $0xe34] sm:$0xf]
      %v3246 = vld [vmem:[%s2 + $0xf] sm:$0x1]
      %v3248 = vlaneseq
      %v3249 = vshrl.u32 %v3248, 7
      %v3250 = vsub.s32 0, %v3249
      %v3251 = vrot.slane %v3246, %v3250
      %v3269 = vunpack.c.l.b16 %v3230
      %v3270 = vunpack.c.l.b16 %v3231
      %v3271 = vunpack.c.l.b16 %v3232
      %v3272 = vunpack.c.l.b16 %v3233
      %v3273 = vunpack.c.l.b16 %v3234
      %v3274 = vunpack.c.l.b16 %v3235
      %v3275 = vunpack.c.l.b16 %v3236
      %v3276 = vunpack.c.l.b16 %v3237
      %v3277 = vunpack.c.l.b16 %v3238
      %v3278 = vunpack.c.l.b16 %v3239
      %v3279 = vunpack.c.l.b16 %v3240
      %v3280 = vunpack.c.l.b16 %v3241
      %v3281 = vunpack.c.l.b16 %v3242
      %v3282 = vunpack.c.l.b16 %v3243
      %v3283 = vunpack.c.l.b16 %v3244
      %v3284 = vunpack.c.l.b16 %v3245
      %v3285 = vpack.c.b16 %v3270, %v3269
      %v3286 = vpack.c.b16 %v3272, %v3271
      %v3287 = vpack.c.b16 %v3274, %v3273
      %v3288 = vpack.c.b16 %v3276, %v3275
      %v3289 = vpack.c.b16 %v3278, %v3277
      %v3290 = vpack.c.b16 %v3280, %v3279
      %v3291 = vpack.c.b16 %v3282, %v3281
      %v3292 = vpack.c.b16 %v3284, %v3283
      %3301 = vmatprep.subr.bf16.mxu0 0
      %3302 = vmatpush1.bf16.msra.mxu0 %v3285
      %3303 = vmatprep.subr.bf16.mxu0 0
      %3304 = vmatpush1.bf16.msra.mxu0 %v3286
      %3305 = vmatprep.subr.bf16.mxu0 0
      %3306 = vmatpush1.bf16.msra.mxu0 %v3287
      %3307 = vmatprep.subr.bf16.mxu0 0
      %3308 = vmatpush1.bf16.msra.mxu0 %v3288
      %3309 = vmatprep.subr.bf16.mxu0 0
      %3310 = vmatpush1.bf16.msra.mxu0 %v3289
      %3311 = vmatprep.subr.bf16.mxu0 0
      %3312 = vmatpush1.bf16.msra.mxu0 %v3290
      %3313 = vmatprep.subr.bf16.mxu0 0
      %3314 = vmatpush1.bf16.msra.mxu0 %v3291
      %3315 = vmatprep.subr.bf16.mxu0 0
      %3316 = vmatpush1.bf16.msra.mxu0 %v3292
      %3317 = vmatprep.subr.bf16.mxu0 0
      %3318 = vmatpush1.bf16.msra.mxu0 0
      %3319 = vmatprep.subr.bf16.mxu0 0
      %3320 = vmatpush1.bf16.msra.mxu0 0
      %3321 = vmatprep.subr.bf16.mxu0 0
      %3322 = vmatpush1.bf16.msra.mxu0 0
      %3323 = vmatprep.subr.bf16.mxu0 0
      %3324 = vmatpush1.bf16.msra.mxu0 0
      %3325 = vmatprep.subr.bf16.mxu0 0
      %3326 = vmatpush1.bf16.msra.mxu0 0
      %3327 = vmatprep.subr.bf16.mxu0 0
      %3328 = vmatpush1.bf16.msra.mxu0 0
      %3329 = vmatprep.subr.bf16.mxu0 0
      %3330 = vmatpush1.bf16.msra.mxu0 0
      %3331 = vmatprep.subr.bf16.mxu0 0
      %3332 = vmatpush1.bf16.msra.mxu0 0
      %3333 = vmatprep.mubr.bf16.mxu0 0
      %3334 = vmatmul.mubr.bf16.gmra.mrb[0].mxu0 %v3228
      %v3335 = vpop.f32.mrb[0].mxu0
      %v3336 = vadd.f32 %v3251, %v3335
      %v3337 = vpop.f32.mrb[0].mxu0
      %v3338 = vpop.f32.mrb[0].mxu0
      %v3339 = vadd.f32 %v3251, %v3338
      %v3340 = vpop.f32.mrb[0].mxu0
      %3341 = vmatprep.mubr.bf16.mxu0 0
      %3342 = vmatmul.mubr.bf16.gmra.mrb[0].mxu0 %v3229
      %v3343 = vpop.f32.mrb[0].mxu0
      %v3344 = vadd.f32 %v3251, %v3343
      %v3345 = vpop.f32.mrb[0].mxu0
      %v3346 = vpop.f32.mrb[0].mxu0
      %v3347 = vadd.f32 %v3251, %v3346
      %v3348 = vpop.f32.mrb[0].mxu0
      %3349 = vdwg.mxu0
      %v3350 = vmax.f32 %v3336, 0.0
      %v3351 = vmax.f32 %v3339, 0.0
      %v3352 = vmax.f32 %v3344, 0.0
      %v3353 = vmax.f32 %v3347, 0.0
      %v3354 = vmin.f32 %v3350, 6.0
      %v3355 = vmin.f32 %v3351, 6.0
      %v3356 = vmin.f32 %v3352, 6.0
      %v3357 = vmin.f32 %v3353, 6.0
      %v3358 = vpack.c.bf16 %v3355, %v3354
      %v3359 = vpack.c.bf16 %v3357, %v3356
      %v3360 = vld [vmem:[%s1 + $0xe40] sm:$0xf]
      %v3361 = vld [vmem:[%s1 + $0xe4c] sm:$0xf]
      %v3362 = vld [vmem:[%s1 + $0xe58] sm:$0xf]
      %v3363 = vld [vmem:[%s1 + $0xe64] sm:$0xf]
      %v3364 = vld [vmem:[%s1 + $0xe70] sm:$0xf]
      %v3365 = vld [vmem:[%s1 + $0xe7c] sm:$0xf]
      %v3366 = vld [vmem:[%s1 + $0xe88] sm:$0xf]
      %v3367 = vld [vmem:[%s1 + $0xe94] sm:$0xf]
      %v3368 = vld [vmem:[%s1 + $0xea0] sm:$0xf]
      %v3369 = vld [vmem:[%s1 + $0xeac] sm:$0xf]
      %v3370 = vld [vmem:[%s1 + $0xeb8] sm:$0xf]
      %v3371 = vld [vmem:[%s1 + $0xec4] sm:$0xf]
      %v3372 = vld [vmem:[%s1 + $0xed0] sm:$0xf]
      %v3373 = vld [vmem:[%s1 + $0xedc] sm:$0xf]
      %v3374 = vld [vmem:[%s1 + $0xee8] sm:$0xf]
      %v3375 = vld [vmem:[%s1 + $0xef4] sm:$0xf]
      %v3376 = vld [vmem:[%s2 + $0x10] sm:$0x1]
      %v3378 = vlaneseq
      %v3379 = vshrl.u32 %v3378, 7
      %v3380 = vsub.s32 0, %v3379
      %v3381 = vrot.slane %v3376, %v3380
      %v3399 = vunpack.c.l.b16 %v3360
      %v3400 = vunpack.c.l.b16 %v3361
      %v3401 = vunpack.c.l.b16 %v3362
      %v3402 = vunpack.c.l.b16 %v3363
      %v3403 = vunpack.c.l.b16 %v3364
      %v3404 = vunpack.c.l.b16 %v3365
      %v3405 = vunpack.c.l.b16 %v3366
      %v3406 = vunpack.c.l.b16 %v3367
      %v3407 = vunpack.c.l.b16 %v3368
      %v3408 = vunpack.c.l.b16 %v3369
      %v3409 = vunpack.c.l.b16 %v3370
      %v3410 = vunpack.c.l.b16 %v3371
      %v3411 = vunpack.c.l.b16 %v3372
      %v3412 = vunpack.c.l.b16 %v3373
      %v3413 = vunpack.c.l.b16 %v3374
      %v3414 = vunpack.c.l.b16 %v3375
      %v3415 = vpack.c.b16 %v3400, %v3399
      %v3416 = vpack.c.b16 %v3402, %v3401
      %v3417 = vpack.c.b16 %v3404, %v3403
      %v3418 = vpack.c.b16 %v3406, %v3405
      %v3419 = vpack.c.b16 %v3408, %v3407
      %v3420 = vpack.c.b16 %v3410, %v3409
      %v3421 = vpack.c.b16 %v3412, %v3411
      %v3422 = vpack.c.b16 %v3414, %v3413
      %3431 = vmatprep.subr.bf16.mxu0 0
      %3432 = vmatpush1.bf16.msra.mxu0 %v3415
      %3433 = vmatprep.subr.bf16.mxu0 0
      %3434 = vmatpush1.bf16.msra.mxu0 %v3416
      %3435 = vmatprep.subr.bf16.mxu0 0
      %3436 = vmatpush1.bf16.msra.mxu0 %v3417
      %3437 = vmatprep.subr.bf16.mxu0 0
      %3438 = vmatpush1.bf16.msra.mxu0 %v3418
      %3439 = vmatprep.subr.bf16.mxu0 0
      %3440 = vmatpush1.bf16.msra.mxu0 %v3419
      %3441 = vmatprep.subr.bf16.mxu0 0
      %3442 = vmatpush1.bf16.msra.mxu0 %v3420
      %3443 = vmatprep.subr.bf16.mxu0 0
      %3444 = vmatpush1.bf16.msra.mxu0 %v3421
      %3445 = vmatprep.subr.bf16.mxu0 0
      %3446 = vmatpush1.bf16.msra.mxu0 %v3422
      %3447 = vmatprep.subr.bf16.mxu0 0
      %3448 = vmatpush1.bf16.msra.mxu0 0
      %3449 = vmatprep.subr.bf16.mxu0 0
      %3450 = vmatpush1.bf16.msra.mxu0 0
      %3451 = vmatprep.subr.bf16.mxu0 0
      %3452 = vmatpush1.bf16.msra.mxu0 0
      %3453 = vmatprep.subr.bf16.mxu0 0
      %3454 = vmatpush1.bf16.msra.mxu0 0
      %3455 = vmatprep.subr.bf16.mxu0 0
      %3456 = vmatpush1.bf16.msra.mxu0 0
      %3457 = vmatprep.subr.bf16.mxu0 0
      %3458 = vmatpush1.bf16.msra.mxu0 0
      %3459 = vmatprep.subr.bf16.mxu0 0
      %3460 = vmatpush1.bf16.msra.mxu0 0
      %3461 = vmatprep.subr.bf16.mxu0 0
      %3462 = vmatpush1.bf16.msra.mxu0 0
      %3463 = vmatprep.mubr.bf16.mxu0 0
      %3464 = vmatmul.mubr.bf16.gmra.mrb[0].mxu0 %v3358
      %v3465 = vpop.f32.mrb[0].mxu0
      %v3466 = vadd.f32 %v3381, %v3465
      %v3467 = vpop.f32.mrb[0].mxu0
      %v3468 = vpop.f32.mrb[0].mxu0
      %v3469 = vadd.f32 %v3381, %v3468
      %v3470 = vpop.f32.mrb[0].mxu0
      %3471 = vmatprep.mubr.bf16.mxu0 0
      %3472 = vmatmul.mubr.bf16.gmra.mrb[0].mxu0 %v3359
      %v3473 = vpop.f32.mrb[0].mxu0
      %v3474 = vadd.f32 %v3381, %v3473
      %v3475 = vpop.f32.mrb[0].mxu0
      %v3476 = vpop.f32.mrb[0].mxu0
      %v3477 = vadd.f32 %v3381, %v3476
      %v3478 = vpop.f32.mrb[0].mxu0
      %3479 = vdwg.mxu0
      %v3480 = vxor.u32 %v3466, 2147483648
      %v3481 = vxor.u32 %v3469, 2147483648
      %v3482 = vxor.u32 %v3474, 2147483648
      %v3483 = vxor.u32 %v3477, 2147483648
      %v3484 = vmul.f32 %v3480, 1.442695
      %v3485 = vpow.pop %v3484
      %v3486 = vmul.f32 %v3481, 1.442695
      %v3487 = vpow.pop %v3486
      %v3488 = vmul.f32 %v3482, 1.442695
      %v3489 = vpow.pop %v3488
      %v3490 = vmul.f32 %v3483, 1.442695
      %v3491 = vpow.pop %v3490
      %v3492 = vadd.f32 %v3485, 1.0
      %v3493 = vadd.f32 %v3487, 1.0
      %v3494 = vadd.f32 %v3489, 1.0
      %v3495 = vadd.f32 %v3491, 1.0
      %v3496 = vrcp.pop %v3492
      %v3497 = vmul.f32 1.0, %v3496
      %v3498 = vrcp.pop %v3493
      %v3499 = vmul.f32 1.0, %v3498
      %v3500 = vrcp.pop %v3494
      %v3501 = vmul.f32 1.0, %v3500
      %v3502 = vrcp.pop %v3495
      %v3503 = vmul.f32 1.0, %v3502
      %3504 = vst [vmem:[%s175] sm:$0xff] %v3497
      %3505 = vst [vmem:[%s175 + $0x8] sm:$0xff] %v3499
      %3506 = vst [vmem:[%s175 + $0x10] sm:$0xff] %v3501
      %3507 = vst [vmem:[%s175 + $0x18] sm:$0xff] %v3503
      %s3508 = smul.u32 4, %s14
      %p3509 = scmp.lt.s32.totalorder %s3508, 7
      %s3510 = scalar_select %p3509, %s3508, 7
      %s3511 = smul.addr %s3510, 8
      %s3512 = scalar_lea.vmem %s3, %s3511
      // Predicated region
      $region33: #{lmci_forward.1} parent=31 // pred_check
        %p3513 = pneg %p100
      $region34: #{lmci_forward.1} parent=31 // pred_check_branch
        %3515 = sbr.rel (%p3513) target = $region36
      $region35: #{lmci_forward.1} parent=31 // pred_region
        %s3516 = smul.u32 4, %s14
      $region36: #{lmci_forward.1} parent=31 // pred_fallthru
        _
    $region32: #{lmci_forward.1} parent=5 // pred_fallthru
      _
    %p3517 = scmp.le.s32.totalorder 2, %s9
    // Predicated region
    $region37: #{lmci_forward.1} parent=5 // pred_check
      %p3518 = pneg %p3517
    $region38: #{lmci_forward.1} parent=5 // pred_check_branch
      %3520 = sbr.rel (%p3518) target = $region40
    $region39: #{lmci_forward.1} parent=5 // pred_region
      %s3521 = ssub.s32 %s9, 2
      // Predicated region
      $region41: #{lmci_forward.1} parent=39 // pred_check
        %p3522 = pneg %p106
      $region42: #{lmci_forward.1} parent=39 // pred_check_branch
        %3524 = sbr.rel (%p3522) target = $region44
      $region43: #{lmci_forward.1} parent=39 // pred_region
        %s3525 = smul.u32 4, %s15
        %p3526 = scmp.lt.s32.totalorder %s3525, 7
        %s3527 = scalar_select %p3526, %s3525, 7
        %s3528 = smul.addr %s3527, 8
        %s3529 = scalar_lea.vmem %s3, %s3528
      $region44: #{lmci_forward.1} parent=39 // pred_fallthru
        _
    $region40: #{lmci_forward.1} parent=5 // pred_fallthru
      _
  $region6: #{lmci_forward.1} parent=0 // loop_footer
    %s13 = sadd.s32 1, %s9
  $region7: #{lmci_forward.1} parent=0 // loop_footer_branch
    %8 = sbr.rel target = $region3
  $region8: #{lmci_forward.1} parent=0 // loop_exit
    _

</llo_original>
